<compile_context>
chip_gen: v7x
topology: tpu7x:2x2x1
jax: 0.10.0
libtpu: 0.0.40
codegen_flags: <defaults>
</compile_context>

<pallas_src>
import jax
import jax.numpy as jnp
from jax.experimental import pallas as pl
from jax.experimental.pallas import tpu as pltpu

C1 = 0.01 ** 2
C2 = 0.03 ** 2


def ssim_kernel(x_ref, y_ref, o_ref):
    # x_ref, y_ref, o_ref: (B, H, W) blocks -- B unpadded (n, c) planes per grid step.
    B, H, W = x_ref.shape
    x = x_ref[...]
    y = y_ref[...]

    # ---- fused ReflectionPad2d(1) + separable 3x3 average pool (stride 1) ----
    def pad_h(a):   # (B, H, W) -> (B, H+2, W): reflect rows 1 and H-2
        return jnp.concatenate([a[:, 1:2, :], a, a[:, H - 2:H - 1, :]], axis=1)

    def pad_w(a):   # (B, H, W) -> (B, H, W+2): reflect cols 1 and W-2
        return jnp.concatenate([a[:, :, 1:2], a, a[:, :, W - 2:W - 1]], axis=2)

    def rowsum3(a):  # (B, H+2, W) -> (B, H, W): 3-tap sum along H
        return a[:, 0:H, :] + a[:, 1:H + 1, :] + a[:, 2:H + 2, :]

    def colsum3(a):  # (B, H, W+2) -> (B, H, W): 3-tap sum along W
        return a[:, :, 0:W] + a[:, :, 1:W + 1] + a[:, :, 2:W + 2]

    def pool3x3(a):  # reflect-padded 3x3 average pool, stride 1 (separable)
        return colsum3(pad_w(rowsum3(pad_h(a)))) * (1.0 / 9.0)

    mu_x = pool3x3(x)
    mu_y = pool3x3(y)
    sigma_x = pool3x3(x * x) - mu_x * mu_x
    sigma_y = pool3x3(y * y) - mu_y * mu_y
    sigma_xy = pool3x3(x * y) - mu_x * mu_y

    ssim_n = (2.0 * mu_x * mu_y + C1) * (2.0 * sigma_xy + C2)
    ssim_d = (mu_x * mu_x + mu_y * mu_y + C1) * (sigma_x + sigma_y + C2)

    o_ref[...] = jnp.clip((1.0 - ssim_n / ssim_d) * 0.5, 0.0, 1.0)


def _pick_plane_batch(nc, h, w, vmem_budget_bytes):
    """Largest divisor of nc that fits a VMEM budget, preferring >=2 grid steps."""
    plane_bytes = h * w * 4
    # ~6x plane bytes for double-buffered inputs/output + ~10x for in-body temporaries.
    per_plane_cost = plane_bytes * 16
    cap = max(1, vmem_budget_bytes // per_plane_cost)
    divisors = [d for d in range(1, nc + 1) if nc % d == 0]
    fitting = [d for d in divisors if d <= cap] or [1]
    b = max(fitting)
    # Keep at least 2 grid steps when possible so v7x's two TensorCores both get work.
    if nc // b < 2:
        smaller = [d for d in fitting if nc // d >= 2]
        if smaller:
            b = max(smaller)
    return b


def ssim(x, y):
    """SSIM loss map matching the PyTorch SSIM module. x, y: (N, C, H, W)."""
    N, C, H, W = x.shape
    NC = N * C
    xf = x.astype(jnp.float32).reshape(NC, H, W)
    yf = y.astype(jnp.float32).reshape(NC, H, W)

    B = _pick_plane_batch(NC, H, W, vmem_budget_bytes=32 * 1024 * 1024)
    grid = (NC // B,)

    elems = NC * H * W
    cost = pl.CostEstimate(
        flops=55 * elems,            # ~5 pools (5 ops each) + elementwise SSIM math
        transcendentals=0,
        bytes_accessed=3 * elems * 4,  # read x, read y, write out (unpadded, f32)
    )

    out = pl.pallas_call(
        ssim_kernel,
        out_shape=jax.ShapeDtypeStruct((NC, H, W), jnp.float32),
        grid_spec=pltpu.PrefetchScalarGridSpec(
            num_scalar_prefetch=0,
            grid=grid,
            in_specs=[
                pl.BlockSpec((B, H, W), lambda i: (i, 0, 0)),
                pl.BlockSpec((B, H, W), lambda i: (i, 0, 0)),
            ],
            out_specs=pl.BlockSpec((B, H, W), lambda i: (i, 0, 0)),
        ),
        compiler_params=pltpu.CompilerParams(
            dimension_semantics=("parallel",),
            vmem_limit_bytes=48 * 1024 * 1024,
        ),
        cost_estimate=cost,
    )(xf, yf)

    return out.reshape(N, C, H, W)


def _ssim_reference(x, y):
    # Pure-JAX reference (pad + 9-tap pool, same as the PyTorch module).
    xp = jnp.pad(x, ((0, 0), (0, 0), (1, 1), (1, 1)), mode="reflect")
    yp = jnp.pad(y, ((0, 0), (0, 0), (1, 1), (1, 1)), mode="reflect")
    H, W = x.shape[2], x.shape[3]

    def pool(a):
        s = 0.0
        for di in range(3):
            for dj in range(3):
                s = s + a[:, :, di:di + H, dj:dj + W]
        return s / 9.0

    mu_x, mu_y = pool(xp), pool(yp)
    sx = pool(xp * xp) - mu_x * mu_x
    sy = pool(yp * yp) - mu_y * mu_y
    sxy = pool(xp * yp) - mu_x * mu_y
    n = (2 * mu_x * mu_y + C1) * (2 * sxy + C2)
    d = (mu_x ** 2 + mu_y ** 2 + C1) * (sx + sy + C2)
    return jnp.clip((1 - n / d) / 2, 0.0, 1.0)


if __name__ == "__main__":
    key = jax.random.PRNGKey(0)
    kx, ky = jax.random.split(key)
    N, C, H, W = 2, 4, 16, 16
    x = jax.random.uniform(kx, (N, C, H, W), dtype=jnp.float32)
    y = jax.random.uniform(ky, (N, C, H, W), dtype=jnp.float32)

    out = ssim(x, y)
    jax.block_until_ready(out)

    ref = _ssim_reference(x, y)
    assert out.shape == (N, C, H, W)
    assert jnp.allclose(out, ref, atol=1e-5, rtol=1e-5)

    print("KERNEL_OK")
</pallas_src>

<mosaic_0001>
module attributes {stable_mosaic.version = 11 : i64} {
  func.func @ssim_kernel(%arg0: i32, %arg1: memref<4x16x16xf32, #tpu.memory_space<vmem>>, %arg2: memref<4x16x16xf32, #tpu.memory_space<vmem>>, %arg3: memref<4x16x16xf32, #tpu.memory_space<vmem>>) attributes {dimension_semantics = [#tpu.dimension_semantics<parallel>], iteration_bounds = array<i64: 2>, scalar_prefetch = 0 : i64, scratch_operands = 0 : i64, tpu.core_type = #tpu.core_type<tc>, window_params = [{transform_indices = @transform_0, window_bounds = array<i64: 4, 16, 16>}, {transform_indices = @transform_1, window_bounds = array<i64: 4, 16, 16>}, {transform_indices = @transform_2, window_bounds = array<i64: 4, 16, 16>}]} {
    %c0 = arith.constant 0 : index
    %c0_0 = arith.constant 0 : index
    %c0_1 = arith.constant 0 : index
    %0 = vector.load %arg1[%c0, %c0_0, %c0_1] : memref<4x16x16xf32, #tpu.memory_space<vmem>>, vector<4x16x16xf32>
    %c0_2 = arith.constant 0 : index
    %c0_3 = arith.constant 0 : index
    %c0_4 = arith.constant 0 : index
    %1 = vector.load %arg2[%c0_2, %c0_3, %c0_4] : memref<4x16x16xf32, #tpu.memory_space<vmem>>, vector<4x16x16xf32>
    %2 = vector.extract_strided_slice %0 {offsets = [0, 1, 0], sizes = [4, 1, 16], strides = [1, 1, 1]} : vector<4x16x16xf32> to vector<4x1x16xf32>
    %3 = vector.extract_strided_slice %0 {offsets = [0, 14, 0], sizes = [4, 1, 16], strides = [1, 1, 1]} : vector<4x16x16xf32> to vector<4x1x16xf32>
    %4 = tpu.concatenate %2, %0, %3 in 1 : vector<4x1x16xf32>, vector<4x16x16xf32>, vector<4x1x16xf32> -> vector<4x18x16xf32>
    %5 = vector.extract_strided_slice %4 {offsets = [0, 0, 0], sizes = [4, 16, 16], strides = [1, 1, 1]} : vector<4x18x16xf32> to vector<4x16x16xf32>
    %6 = vector.extract_strided_slice %4 {offsets = [0, 1, 0], sizes = [4, 16, 16], strides = [1, 1, 1]} : vector<4x18x16xf32> to vector<4x16x16xf32>
    %7 = arith.addf %5, %6 : vector<4x16x16xf32>
    %8 = vector.extract_strided_slice %4 {offsets = [0, 2, 0], sizes = [4, 16, 16], strides = [1, 1, 1]} : vector<4x18x16xf32> to vector<4x16x16xf32>
    %9 = arith.addf %7, %8 : vector<4x16x16xf32>
    %10 = vector.extract_strided_slice %9 {offsets = [0, 0, 1], sizes = [4, 16, 1], strides = [1, 1, 1]} : vector<4x16x16xf32> to vector<4x16x1xf32>
    %11 = vector.extract_strided_slice %9 {offsets = [0, 0, 14], sizes = [4, 16, 1], strides = [1, 1, 1]} : vector<4x16x16xf32> to vector<4x16x1xf32>
    %12 = tpu.concatenate %10, %9, %11 in 2 : vector<4x16x1xf32>, vector<4x16x16xf32>, vector<4x16x1xf32> -> vector<4x16x18xf32>
    %13 = vector.extract_strided_slice %12 {offsets = [0, 0, 0], sizes = [4, 16, 16], strides = [1, 1, 1]} : vector<4x16x18xf32> to vector<4x16x16xf32>
    %14 = vector.extract_strided_slice %12 {offsets = [0, 0, 1], sizes = [4, 16, 16], strides = [1, 1, 1]} : vector<4x16x18xf32> to vector<4x16x16xf32>
    %15 = arith.addf %13, %14 : vector<4x16x16xf32>
    %16 = vector.extract_strided_slice %12 {offsets = [0, 0, 2], sizes = [4, 16, 16], strides = [1, 1, 1]} : vector<4x16x18xf32> to vector<4x16x16xf32>
    %17 = arith.addf %15, %16 : vector<4x16x16xf32>
    %cst = arith.constant 0.111111112 : f32
    %18 = vector.broadcast %cst : f32 to vector<4x16x16xf32>
    %19 = arith.mulf %17, %18 : vector<4x16x16xf32>
    %20 = vector.extract_strided_slice %1 {offsets = [0, 1, 0], sizes = [4, 1, 16], strides = [1, 1, 1]} : vector<4x16x16xf32> to vector<4x1x16xf32>
    %21 = vector.extract_strided_slice %1 {offsets = [0, 14, 0], sizes = [4, 1, 16], strides = [1, 1, 1]} : vector<4x16x16xf32> to vector<4x1x16xf32>
    %22 = tpu.concatenate %20, %1, %21 in 1 : vector<4x1x16xf32>, vector<4x16x16xf32>, vector<4x1x16xf32> -> vector<4x18x16xf32>
    %23 = vector.extract_strided_slice %22 {offsets = [0, 0, 0], sizes = [4, 16, 16], strides = [1, 1, 1]} : vector<4x18x16xf32> to vector<4x16x16xf32>
    %24 = vector.extract_strided_slice %22 {offsets = [0, 1, 0], sizes = [4, 16, 16], strides = [1, 1, 1]} : vector<4x18x16xf32> to vector<4x16x16xf32>
    %25 = arith.addf %23, %24 : vector<4x16x16xf32>
    %26 = vector.extract_strided_slice %22 {offsets = [0, 2, 0], sizes = [4, 16, 16], strides = [1, 1, 1]} : vector<4x18x16xf32> to vector<4x16x16xf32>
    %27 = arith.addf %25, %26 : vector<4x16x16xf32>
    %28 = vector.extract_strided_slice %27 {offsets = [0, 0, 1], sizes = [4, 16, 1], strides = [1, 1, 1]} : vector<4x16x16xf32> to vector<4x16x1xf32>
    %29 = vector.extract_strided_slice %27 {offsets = [0, 0, 14], sizes = [4, 16, 1], strides = [1, 1, 1]} : vector<4x16x16xf32> to vector<4x16x1xf32>
    %30 = tpu.concatenate %28, %27, %29 in 2 : vector<4x16x1xf32>, vector<4x16x16xf32>, vector<4x16x1xf32> -> vector<4x16x18xf32>
    %31 = vector.extract_strided_slice %30 {offsets = [0, 0, 0], sizes = [4, 16, 16], strides = [1, 1, 1]} : vector<4x16x18xf32> to vector<4x16x16xf32>
    %32 = vector.extract_strided_slice %30 {offsets = [0, 0, 1], sizes = [4, 16, 16], strides = [1, 1, 1]} : vector<4x16x18xf32> to vector<4x16x16xf32>
    %33 = arith.addf %31, %32 : vector<4x16x16xf32>
    %34 = vector.extract_strided_slice %30 {offsets = [0, 0, 2], sizes = [4, 16, 16], strides = [1, 1, 1]} : vector<4x16x18xf32> to vector<4x16x16xf32>
    %35 = arith.addf %33, %34 : vector<4x16x16xf32>
    %cst_5 = arith.constant 0.111111112 : f32
    %36 = vector.broadcast %cst_5 : f32 to vector<4x16x16xf32>
    %37 = arith.mulf %35, %36 : vector<4x16x16xf32>
    %38 = arith.mulf %0, %0 : vector<4x16x16xf32>
    %39 = vector.extract_strided_slice %38 {offsets = [0, 1, 0], sizes = [4, 1, 16], strides = [1, 1, 1]} : vector<4x16x16xf32> to vector<4x1x16xf32>
    %40 = vector.extract_strided_slice %38 {offsets = [0, 14, 0], sizes = [4, 1, 16], strides = [1, 1, 1]} : vector<4x16x16xf32> to vector<4x1x16xf32>
    %41 = tpu.concatenate %39, %38, %40 in 1 : vector<4x1x16xf32>, vector<4x16x16xf32>, vector<4x1x16xf32> -> vector<4x18x16xf32>
    %42 = vector.extract_strided_slice %41 {offsets = [0, 0, 0], sizes = [4, 16, 16], strides = [1, 1, 1]} : vector<4x18x16xf32> to vector<4x16x16xf32>
    %43 = vector.extract_strided_slice %41 {offsets = [0, 1, 0], sizes = [4, 16, 16], strides = [1, 1, 1]} : vector<4x18x16xf32> to vector<4x16x16xf32>
    %44 = arith.addf %42, %43 : vector<4x16x16xf32>
    %45 = vector.extract_strided_slice %41 {offsets = [0, 2, 0], sizes = [4, 16, 16], strides = [1, 1, 1]} : vector<4x18x16xf32> to vector<4x16x16xf32>
    %46 = arith.addf %44, %45 : vector<4x16x16xf32>
    %47 = vector.extract_strided_slice %46 {offsets = [0, 0, 1], sizes = [4, 16, 1], strides = [1, 1, 1]} : vector<4x16x16xf32> to vector<4x16x1xf32>
    %48 = vector.extract_strided_slice %46 {offsets = [0, 0, 14], sizes = [4, 16, 1], strides = [1, 1, 1]} : vector<4x16x16xf32> to vector<4x16x1xf32>
    %49 = tpu.concatenate %47, %46, %48 in 2 : vector<4x16x1xf32>, vector<4x16x16xf32>, vector<4x16x1xf32> -> vector<4x16x18xf32>
    %50 = vector.extract_strided_slice %49 {offsets = [0, 0, 0], sizes = [4, 16, 16], strides = [1, 1, 1]} : vector<4x16x18xf32> to vector<4x16x16xf32>
    %51 = vector.extract_strided_slice %49 {offsets = [0, 0, 1], sizes = [4, 16, 16], strides = [1, 1, 1]} : vector<4x16x18xf32> to vector<4x16x16xf32>
    %52 = arith.addf %50, %51 : vector<4x16x16xf32>
    %53 = vector.extract_strided_slice %49 {offsets = [0, 0, 2], sizes = [4, 16, 16], strides = [1, 1, 1]} : vector<4x16x18xf32> to vector<4x16x16xf32>
    %54 = arith.addf %52, %53 : vector<4x16x16xf32>
    %cst_6 = arith.constant 0.111111112 : f32
    %55 = vector.broadcast %cst_6 : f32 to vector<4x16x16xf32>
    %56 = arith.mulf %54, %55 : vector<4x16x16xf32>
    %57 = arith.mulf %19, %19 : vector<4x16x16xf32>
    %58 = arith.subf %56, %57 : vector<4x16x16xf32>
    %59 = arith.mulf %1, %1 : vector<4x16x16xf32>
    %60 = vector.extract_strided_slice %59 {offsets = [0, 1, 0], sizes = [4, 1, 16], strides = [1, 1, 1]} : vector<4x16x16xf32> to vector<4x1x16xf32>
    %61 = vector.extract_strided_slice %59 {offsets = [0, 14, 0], sizes = [4, 1, 16], strides = [1, 1, 1]} : vector<4x16x16xf32> to vector<4x1x16xf32>
    %62 = tpu.concatenate %60, %59, %61 in 1 : vector<4x1x16xf32>, vector<4x16x16xf32>, vector<4x1x16xf32> -> vector<4x18x16xf32>
    %63 = vector.extract_strided_slice %62 {offsets = [0, 0, 0], sizes = [4, 16, 16], strides = [1, 1, 1]} : vector<4x18x16xf32> to vector<4x16x16xf32>
    %64 = vector.extract_strided_slice %62 {offsets = [0, 1, 0], sizes = [4, 16, 16], strides = [1, 1, 1]} : vector<4x18x16xf32> to vector<4x16x16xf32>
    %65 = arith.addf %63, %64 : vector<4x16x16xf32>
    %66 = vector.extract_strided_slice %62 {offsets = [0, 2, 0], sizes = [4, 16, 16], strides = [1, 1, 1]} : vector<4x18x16xf32> to vector<4x16x16xf32>
    %67 = arith.addf %65, %66 : vector<4x16x16xf32>
    %68 = vector.extract_strided_slice %67 {offsets = [0, 0, 1], sizes = [4, 16, 1], strides = [1, 1, 1]} : vector<4x16x16xf32> to vector<4x16x1xf32>
    %69 = vector.extract_strided_slice %67 {offsets = [0, 0, 14], sizes = [4, 16, 1], strides = [1, 1, 1]} : vector<4x16x16xf32> to vector<4x16x1xf32>
    %70 = tpu.concatenate %68, %67, %69 in 2 : vector<4x16x1xf32>, vector<4x16x16xf32>, vector<4x16x1xf32> -> vector<4x16x18xf32>
    %71 = vector.extract_strided_slice %70 {offsets = [0, 0, 0], sizes = [4, 16, 16], strides = [1, 1, 1]} : vector<4x16x18xf32> to vector<4x16x16xf32>
    %72 = vector.extract_strided_slice %70 {offsets = [0, 0, 1], sizes = [4, 16, 16], strides = [1, 1, 1]} : vector<4x16x18xf32> to vector<4x16x16xf32>
    %73 = arith.addf %71, %72 : vector<4x16x16xf32>
    %74 = vector.extract_strided_slice %70 {offsets = [0, 0, 2], sizes = [4, 16, 16], strides = [1, 1, 1]} : vector<4x16x18xf32> to vector<4x16x16xf32>
    %75 = arith.addf %73, %74 : vector<4x16x16xf32>
    %cst_7 = arith.constant 0.111111112 : f32
    %76 = vector.broadcast %cst_7 : f32 to vector<4x16x16xf32>
    %77 = arith.mulf %75, %76 : vector<4x16x16xf32>
    %78 = arith.mulf %37, %37 : vector<4x16x16xf32>
    %79 = arith.subf %77, %78 : vector<4x16x16xf32>
    %80 = arith.mulf %0, %1 : vector<4x16x16xf32>
    %81 = vector.extract_strided_slice %80 {offsets = [0, 1, 0], sizes = [4, 1, 16], strides = [1, 1, 1]} : vector<4x16x16xf32> to vector<4x1x16xf32>
    %82 = vector.extract_strided_slice %80 {offsets = [0, 14, 0], sizes = [4, 1, 16], strides = [1, 1, 1]} : vector<4x16x16xf32> to vector<4x1x16xf32>
    %83 = tpu.concatenate %81, %80, %82 in 1 : vector<4x1x16xf32>, vector<4x16x16xf32>, vector<4x1x16xf32> -> vector<4x18x16xf32>
    %84 = vector.extract_strided_slice %83 {offsets = [0, 0, 0], sizes = [4, 16, 16], strides = [1, 1, 1]} : vector<4x18x16xf32> to vector<4x16x16xf32>
    %85 = vector.extract_strided_slice %83 {offsets = [0, 1, 0], sizes = [4, 16, 16], strides = [1, 1, 1]} : vector<4x18x16xf32> to vector<4x16x16xf32>
    %86 = arith.addf %84, %85 : vector<4x16x16xf32>
    %87 = vector.extract_strided_slice %83 {offsets = [0, 2, 0], sizes = [4, 16, 16], strides = [1, 1, 1]} : vector<4x18x16xf32> to vector<4x16x16xf32>
    %88 = arith.addf %86, %87 : vector<4x16x16xf32>
    %89 = vector.extract_strided_slice %88 {offsets = [0, 0, 1], sizes = [4, 16, 1], strides = [1, 1, 1]} : vector<4x16x16xf32> to vector<4x16x1xf32>
    %90 = vector.extract_strided_slice %88 {offsets = [0, 0, 14], sizes = [4, 16, 1], strides = [1, 1, 1]} : vector<4x16x16xf32> to vector<4x16x1xf32>
    %91 = tpu.concatenate %89, %88, %90 in 2 : vector<4x16x1xf32>, vector<4x16x16xf32>, vector<4x16x1xf32> -> vector<4x16x18xf32>
    %92 = vector.extract_strided_slice %91 {offsets = [0, 0, 0], sizes = [4, 16, 16], strides = [1, 1, 1]} : vector<4x16x18xf32> to vector<4x16x16xf32>
    %93 = vector.extract_strided_slice %91 {offsets = [0, 0, 1], sizes = [4, 16, 16], strides = [1, 1, 1]} : vector<4x16x18xf32> to vector<4x16x16xf32>
    %94 = arith.addf %92, %93 : vector<4x16x16xf32>
    %95 = vector.extract_strided_slice %91 {offsets = [0, 0, 2], sizes = [4, 16, 16], strides = [1, 1, 1]} : vector<4x16x18xf32> to vector<4x16x16xf32>
    %96 = arith.addf %94, %95 : vector<4x16x16xf32>
    %cst_8 = arith.constant 0.111111112 : f32
    %97 = vector.broadcast %cst_8 : f32 to vector<4x16x16xf32>
    %98 = arith.mulf %96, %97 : vector<4x16x16xf32>
    %99 = arith.mulf %19, %37 : vector<4x16x16xf32>
    %100 = arith.subf %98, %99 : vector<4x16x16xf32>
    %cst_9 = arith.constant 2.000000e+00 : f32
    %101 = vector.broadcast %cst_9 : f32 to vector<4x16x16xf32>
    %102 = arith.mulf %101, %19 : vector<4x16x16xf32>
    %103 = arith.mulf %102, %37 : vector<4x16x16xf32>
    %cst_10 = arith.constant 9.99999974E-5 : f32
    %104 = vector.broadcast %cst_10 : f32 to vector<4x16x16xf32>
    %105 = arith.addf %103, %104 : vector<4x16x16xf32>
    %cst_11 = arith.constant 2.000000e+00 : f32
    %106 = vector.broadcast %cst_11 : f32 to vector<4x16x16xf32>
    %107 = arith.mulf %106, %100 : vector<4x16x16xf32>
    %cst_12 = arith.constant 8.99999984E-4 : f32
    %108 = vector.broadcast %cst_12 : f32 to vector<4x16x16xf32>
    %109 = arith.addf %107, %108 : vector<4x16x16xf32>
    %110 = arith.mulf %105, %109 : vector<4x16x16xf32>
    %111 = arith.mulf %19, %19 : vector<4x16x16xf32>
    %112 = arith.mulf %37, %37 : vector<4x16x16xf32>
    %113 = arith.addf %111, %112 : vector<4x16x16xf32>
    %cst_13 = arith.constant 9.99999974E-5 : f32
    %114 = vector.broadcast %cst_13 : f32 to vector<4x16x16xf32>
    %115 = arith.addf %113, %114 : vector<4x16x16xf32>
    %116 = arith.addf %58, %79 : vector<4x16x16xf32>
    %cst_14 = arith.constant 8.99999984E-4 : f32
    %117 = vector.broadcast %cst_14 : f32 to vector<4x16x16xf32>
    %118 = arith.addf %116, %117 : vector<4x16x16xf32>
    %119 = arith.mulf %115, %118 : vector<4x16x16xf32>
    %120 = arith.divf %110, %119 : vector<4x16x16xf32>
    %cst_15 = arith.constant 1.000000e+00 : f32
    %121 = vector.broadcast %cst_15 : f32 to vector<4x16x16xf32>
    %122 = arith.subf %121, %120 : vector<4x16x16xf32>
    %cst_16 = arith.constant 5.000000e-01 : f32
    %123 = vector.broadcast %cst_16 : f32 to vector<4x16x16xf32>
    %124 = arith.mulf %122, %123 : vector<4x16x16xf32>
    %cst_17 = arith.constant 0.000000e+00 : f32
    %cst_18 = arith.constant 1.000000e+00 : f32
    %125 = vector.broadcast %cst_17 : f32 to vector<4x16x16xf32>
    %126 = arith.maximumf %125, %124 : vector<4x16x16xf32>
    %127 = vector.broadcast %cst_18 : f32 to vector<4x16x16xf32>
    %128 = arith.minimumf %127, %126 : vector<4x16x16xf32>
    %c0_19 = arith.constant 0 : index
    %c0_20 = arith.constant 0 : index
    %c0_21 = arith.constant 0 : index
    %129 = vector.load %arg3[%c0_19, %c0_20, %c0_21] : memref<4x16x16xf32, #tpu.memory_space<vmem>>, vector<4x16x16xf32>
    tpu.vector_store %arg3[%c0_19, %c0_20, %c0_21], %128 {strides = array<i32>} : memref<4x16x16xf32, #tpu.memory_space<vmem>>, vector<4x16x16xf32>,
    return
  }
  func.func @transform_0(%arg0: i32) -> (i32, i32, i32) {
    %c0_i32 = arith.constant 0 : i32
    %c0_i32_0 = arith.constant 0 : i32
    %c0_i32_1 = arith.constant 0 : i32
    return %arg0, %c0_i32, %c0_i32_0 : i32, i32, i32
  }
  func.func @transform_1(%arg0: i32) -> (i32, i32, i32) {
    %c0_i32 = arith.constant 0 : i32
    %c0_i32_0 = arith.constant 0 : i32
    %c0_i32_1 = arith.constant 0 : i32
    return %arg0, %c0_i32, %c0_i32_0 : i32, i32, i32
  }
  func.func @transform_2(%arg0: i32) -> (i32, i32, i32) {
    %c0_i32 = arith.constant 0 : i32
    %c0_i32_0 = arith.constant 0 : i32
    %c0_i32_1 = arith.constant 0 : i32
    return %arg0, %c0_i32, %c0_i32_0 : i32, i32, i32
  }
}

</mosaic_0001>

<llo_original>
// kernel: tpu_custom_call.1
$region0: #{tpu_custom_call.1}
  #allocation0 [shape = 'u32[]', space=smem, size = 0x4, offset = 0x4, fixed_abs, tag = 'smem constant byte address 0x4 - core index']
  #allocation1 [shape = 'u32[144,128]{1,0:T(1,128)}', space=vmem, size = 0x12000, scoped, tag = 'internal scratch']
  %s0 = inlined_call_operand.hbm [shape: f32[8,16,16], index: 0, kind: input, shape index: {}]
  %s1 = inlined_call_operand.hbm [shape: f32[8,16,16], index: 1, kind: input, shape index: {}]
  %s2 = inlined_call_operand.hbm [shape: f32[8,16,16], index: 2, kind: output, shape index: {}]
  %s3 = sld [smem:[#allocation0]]
  $region49: #{tpu_custom_call.1} parent=0
    _
  %s5 = ssub.s32 1, %s3
  %s6 = scalar_select 0, %s5, %s3
  $region1: #{tpu_custom_call.1} parent=0
    #allocation2 [shape = 'u8[65536]{0}', space=vmem, size = 0x10000, scoped, tag = 'input window, operand 0']
    #allocation3 [shape = 's32[2]{0}', space=sflag, size = 0x8, scoped, tag = 'scoped memory for tpu_custom_call.1']
    #allocation4 [shape = 's32[2]{0}', space=sflag, size = 0x8, scoped, tag = 'scoped memory for tpu_custom_call.1']
    #allocation5 [shape = 'u8[65536]{0}', space=vmem, size = 0x10000, scoped, tag = 'input window, operand 1']
    #allocation6 [shape = 's32[2]{0}', space=sflag, size = 0x8, scoped, tag = 'scoped memory for tpu_custom_call.1']
    #allocation7 [shape = 'u8[65536]{0}', space=vmem, size = 0x10000, scoped, tag = 'output window, operand 0']
    %7 = vsyncpa [#allocation3], 0
    %s8 = scalar_lea.sflag [#allocation3], 1
    %9 = vsyncpa %s8, 0
    %10 = vsyncpa [#allocation6], 0
    %s11 = scalar_lea.sflag [#allocation6], 1
    %12 = vsyncpa %s11, 0
    %13 = vsyncpa [#allocation4], 0
    %s14 = scalar_lea.sflag [#allocation4], 1
    %15 = vsyncpa %s14, 0
    loop: start=0, step=1, limit=4
    $region2: #{tpu_custom_call.1} parent=1 // loop_pre_header
      _
    $region3: #{tpu_custom_call.1} parent=1 // loop_header
      %s17 = sphi 0, %s21
      %p18 = scmp.ge.s32.totalorder %s17, 4
      %s27 = sphi 0, %s29
      %s30 = sphi 0, %s27
      %s31 = sphi 0, %s30
      %s47 = sphi 0, %s31
      %s53 = sphi 0, %s55
      %s56 = sphi 0, %s53
      %s57 = sphi 0, %s56
      %s73 = sphi 0, %s57
      %s79 = sphi 0, %s81
      %s82 = sphi 0, %s79
      %s83 = sphi 0, %s82
      %s99 = sphi 0, %s83
    $region4: #{tpu_custom_call.1} parent=1 // loop_header_branch
      %20 = sbr.rel (%p18) target = $region8
    $region5: #{tpu_custom_call.1} parent=1 // loop_body
      %s22 = ssub.s32 %s17, 1
      %s23 = ssub.s32 %s17, 2
      %s24 = sadd.s32 %s17, 1
      %s25 = ssub.s32 %s17, %s24
      %p26 = scmp.eq.s32.totalorder %s25, 0
      %s28 = sadd.s32 %s27, 1
      %s29 = scalar_select %p26, %s27, %s28
      %p32 = pneg %p26
      %p33 = scmp.eq.s32.totalorder %s17, 1
      %p34 = por %p32, %p33
      %p35 = scmp.ne.s32.totalorder %s27, %s30
      %p36 = scmp.eq.s32.totalorder %s17, 0
      %p37 = por %p35, %p36
      %p38 = scmp.ne.s32.totalorder %s27, %s30
      %p39 = scmp.eq.s32.totalorder %s22, 1
      %p40 = por %p38, %p39
      %p41 = scmp.ne.s32.totalorder %s30, %s31
      %p42 = scmp.eq.s32.totalorder %s22, 0
      %p43 = por %p41, %p42
      %p44 = scmp.ne.s32.totalorder %s30, %s31
      %p45 = scmp.eq.s32.totalorder %s23, 1
      %p46 = por %p44, %p45
      %p48 = scmp.ne.s32.totalorder %s31, %s47
      %p49 = scmp.eq.s32.totalorder %s23, 0
      %p50 = por %p48, %p49
      %s51 = ssub.s32 %s17, %s24
      %p52 = scmp.eq.s32.totalorder %s51, 0
      %s54 = sadd.s32 %s53, 1
      %s55 = scalar_select %p52, %s53, %s54
      %p58 = pneg %p52
      %p59 = scmp.eq.s32.totalorder %s17, 1
      %p60 = por %p58, %p59
      %p61 = scmp.ne.s32.totalorder %s53, %s56
      %p62 = scmp.eq.s32.totalorder %s17, 0
      %p63 = por %p61, %p62
      %p64 = scmp.ne.s32.totalorder %s53, %s56
      %p65 = scmp.eq.s32.totalorder %s22, 1
      %p66 = por %p64, %p65
      %p67 = scmp.ne.s32.totalorder %s56, %s57
      %p68 = scmp.eq.s32.totalorder %s22, 0
      %p69 = por %p67, %p68
      %p70 = scmp.ne.s32.totalorder %s56, %s57
      %p71 = scmp.eq.s32.totalorder %s23, 1
      %p72 = por %p70, %p71
      %p74 = scmp.ne.s32.totalorder %s57, %s73
      %p75 = scmp.eq.s32.totalorder %s23, 0
      %p76 = por %p74, %p75
      %s77 = ssub.s32 %s17, %s24
      %p78 = scmp.eq.s32.totalorder %s77, 0
      %s80 = sadd.s32 %s79, 1
      %s81 = scalar_select %p78, %s79, %s80
      %p84 = pneg %p78
      %p85 = scmp.eq.s32.totalorder %s17, 1
      %p86 = por %p84, %p85
      %p87 = scmp.ne.s32.totalorder %s79, %s82
      %p88 = scmp.eq.s32.totalorder %s17, 0
      %p89 = por %p87, %p88
      %p90 = scmp.ne.s32.totalorder %s79, %s82
      %p91 = scmp.eq.s32.totalorder %s22, 1
      %p92 = por %p90, %p91
      %p93 = scmp.ne.s32.totalorder %s82, %s83
      %p94 = scmp.eq.s32.totalorder %s22, 0
      %p95 = por %p93, %p94
      %p96 = scmp.ne.s32.totalorder %s82, %s83
      %p97 = scmp.eq.s32.totalorder %s23, 1
      %p98 = por %p96, %p97
      %p100 = scmp.ne.s32.totalorder %s83, %s99
      %p101 = scmp.eq.s32.totalorder %s23, 0
      %p102 = por %p100, %p101
      %p103 = scmp.le.s32.totalorder 1, %s17
      %p104 = scmp.lt.s32.totalorder %s17, 3
      %p105 = pnand %p103, %p104
      %p106 = pneg %p105
      // Predicated region
      $region9: #{tpu_custom_call.1} parent=5 // pred_check
        _
      $region10: #{tpu_custom_call.1} parent=5 // pred_check_branch
        %108 = sbr.rel (%p105) target = $region12
      $region11: #{tpu_custom_call.1} parent=5 // pred_region
        %s109 = ssub.s32 %s17, 1
      $region12: #{tpu_custom_call.1} parent=5 // pred_fallthru
        _
      %p110 = scmp.lt.s32.totalorder %s17, 2
      // Predicated region
      $region13: #{tpu_custom_call.1} parent=5 // pred_check
        %p111 = pneg %p110
      $region14: #{tpu_custom_call.1} parent=5 // pred_check_branch
        %113 = sbr.rel (%p111) target = $region16
      $region15: #{tpu_custom_call.1} parent=5 // pred_region
        // Predicated region
        $region17: #{tpu_custom_call.1} parent=15 // pred_check
          %p114 = pneg %p37
        $region18: #{tpu_custom_call.1} parent=15 // pred_check_branch
          %116 = sbr.rel (%p114) target = $region20
        $region19: #{tpu_custom_call.1} parent=15 // pred_region
          %s117 = sand.u32 %s27, 1
          %s118 = scalar_lea.sflag [#allocation3], %s117
          %s119 = sand.u32 %s27, 1
          %s120 = smul.addr %s119, 64
          %s121 = scalar_lea.vmem [#allocation2], %s120
          %s122 = smul.u32 4, %s17
          %s124 = ssub.s32 1024, 1024
          %125 = vsyncadd %s118, %s124
          %s126 = smul.addr %s122, 2
          %s127 = smul.addr %s126, 128
          %s128 = scalar_lea.hbm %s0, %s127
          %s129 = sshll.u32 %s121, 4
          %s130 = int_to_ptr.vmem [resolvable:$true] %s129
          %135 = dma.hbm_to_vmem [thread:$0]  %s128, 1024, %s130, %s118, 128, 128, 8
        $region20: #{tpu_custom_call.1} parent=15 // pred_fallthru
          _
        // Predicated region
        $region21: #{tpu_custom_call.1} parent=15 // pred_check
          %p136 = pneg %p63
        $region22: #{tpu_custom_call.1} parent=15 // pred_check_branch
          %138 = sbr.rel (%p136) target = $region24
        $region23: #{tpu_custom_call.1} parent=15 // pred_region
          %s139 = sand.u32 %s53, 1
          %s140 = scalar_lea.sflag [#allocation6], %s139
          %s141 = sand.u32 %s53, 1
          %s142 = smul.addr %s141, 64
          %s143 = scalar_lea.vmem [#allocation5], %s142
          %s144 = smul.u32 4, %s17
          %s146 = ssub.s32 1024, 1024
          %147 = vsyncadd %s140, %s146
          %s148 = smul.addr %s144, 2
          %s149 = smul.addr %s148, 128
          %s150 = scalar_lea.hbm %s1, %s149
          %s151 = sshll.u32 %s143, 4
          %s152 = int_to_ptr.vmem [resolvable:$true] %s151
          %157 = dma.hbm_to_vmem [thread:$0]  %s150, 1024, %s152, %s140, 128, 128, 8
        $region24: #{tpu_custom_call.1} parent=15 // pred_fallthru
          _
      $region16: #{tpu_custom_call.1} parent=5 // pred_fallthru
        _
      %p158 = scmp.le.s32.totalorder 1, %s17
      %p159 = scmp.lt.s32.totalorder %s17, 3
      %p160 = pnand %p158, %p159
      %p161 = pneg %p160
      // Predicated region
      $region25: #{tpu_custom_call.1} parent=5 // pred_check
        _
      $region26: #{tpu_custom_call.1} parent=5 // pred_check_branch
        %163 = sbr.rel (%p160) target = $region28
      $region27: #{tpu_custom_call.1} parent=5 // pred_region
        %s164 = ssub.s32 %s17, 1
        %s165 = sand.u32 %s30, 1
        %s166 = scalar_lea.sflag [#allocation3], %s165
        %s167 = sand.u32 %s30, 1
        %s168 = smul.addr %s167, 64
        %s169 = scalar_lea.vmem [#allocation2], %s168
        // Predicated region
        $region29: #{tpu_custom_call.1} parent=27 // pred_check
          %p170 = pneg %p43
        $region30: #{tpu_custom_call.1} parent=27 // pred_check_branch
          %172 = sbr.rel (%p170) target = $region32
        $region31: #{tpu_custom_call.1} parent=27 // pred_region
          %173 = dma.done %s166, 1024
        $region32: #{tpu_custom_call.1} parent=27 // pred_fallthru
          _
        %s174 = sand.u32 %s56, 1
        %s175 = scalar_lea.sflag [#allocation6], %s174
        %s176 = sand.u32 %s56, 1
        %s177 = smul.addr %s176, 64
        %s178 = scalar_lea.vmem [#allocation5], %s177
        // Predicated region
        $region33: #{tpu_custom_call.1} parent=27 // pred_check
          %p179 = pneg %p69
        $region34: #{tpu_custom_call.1} parent=27 // pred_check_branch
          %181 = sbr.rel (%p179) target = $region36
        $region35: #{tpu_custom_call.1} parent=27 // pred_region
          %182 = dma.done %s175, 1024
        $region36: #{tpu_custom_call.1} parent=27 // pred_fallthru
          _
        %s183 = sand.u32 %s30, 1
        %s184 = scalar_lea.sflag [#allocation3], %s183
        %s185 = sand.u32 %s30, 1
        %s186 = smul.addr %s185, 64
        %s187 = scalar_lea.vmem [#allocation2], %s186
        %p188 = pneg %p43
        %p189 = pneg %p40
        %s190 = sand.u32 %s56, 1
        %s191 = scalar_lea.sflag [#allocation6], %s190
        %s192 = sand.u32 %s56, 1
        %s193 = smul.addr %s192, 64
        %s194 = scalar_lea.vmem [#allocation5], %s193
        %p195 = pneg %p69
        %p196 = pneg %p66
        %p197 = pneg %p95
        %p198 = pneg %p92
        %s199 = sand.u32 %s82, 1
        %s200 = scalar_lea.sflag [#allocation4], %s199
        %s201 = sand.u32 %s82, 1
        %s202 = smul.addr %s201, 64
        %s203 = scalar_lea.vmem [#allocation7], %s202
        %s204 = smul.u32 4, %s22
        %s205 = smul.u32 4, %s22
        %s206 = smul.u32 4, %s22
        %v207 = vld [vmem:[%s169] sm:$0xff]
        %v208 = vld [vmem:[%s169 + $0x8] sm:$0xff]
        %v209 = vld [vmem:[%s169 + $0x10] sm:$0xff]
        %v210 = vld [vmem:[%s169 + $0x18] sm:$0xff]
        %v211 = vld [vmem:[%s169 + $0x20] sm:$0xff]
        %v212 = vld [vmem:[%s169 + $0x28] sm:$0xff]
        %v213 = vld [vmem:[%s169 + $0x30] sm:$0xff]
        %v214 = vld [vmem:[%s169 + $0x38] sm:$0xff]
        %v215 = vld [vmem:[%s178] sm:$0xff]
        %v216 = vld [vmem:[%s178 + $0x8] sm:$0xff]
        %v217 = vld [vmem:[%s178 + $0x10] sm:$0xff]
        %v218 = vld [vmem:[%s178 + $0x18] sm:$0xff]
        %v219 = vld [vmem:[%s178 + $0x20] sm:$0xff]
        %v220 = vld [vmem:[%s178 + $0x28] sm:$0xff]
        %v221 = vld [vmem:[%s178 + $0x30] sm:$0xff]
        %v222 = vld [vmem:[%s178 + $0x38] sm:$0xff]
        %v227 = vrot.slane %v207, 1
        %v228 = vrot.slane %v209, 1
        %v229 = vrot.slane %v211, 1
        %v230 = vrot.slane %v213, 1
        %vm239 = vcmask 1040384
        %v240 = vrot.slane %v207, 7
        %v241 = vrot.slane %v208, 7
        %v242 = vsel %vm239, %v240, %v241
        %v243 = vrot.slane %v209, 7
        %v244 = vrot.slane %v210, 7
        %v245 = vsel %vm239, %v243, %v244
        %v246 = vrot.slane %v211, 7
        %v247 = vrot.slane %v212, 7
        %v248 = vsel %vm239, %v246, %v247
        %v249 = vrot.slane %v213, 7
        %v250 = vrot.slane %v214, 7
        %v251 = vsel %vm239, %v249, %v250
        %v264 = vrot.slane %v208, 5
        %v265 = vrot.slane %v210, 5
        %v266 = vrot.slane %v212, 5
        %v267 = vrot.slane %v214, 5
        %v272 = vsel %vm239, %v227, %v240
        %v273 = vsel %vm239, %v228, %v243
        %v274 = vsel %vm239, %v229, %v246
        %v275 = vsel %vm239, %v230, %v249
        %v276 = vsel %vm239, %v241, %v264
        %v277 = vsel %vm239, %v244, %v265
        %v278 = vsel %vm239, %v247, %v266
        %v279 = vsel %vm239, %v250, %v267
        %vm288 = vcmask 1046528
        %v289 = vrot.slane %v272, 1
        %v290 = vrot.slane %v242, 1
        %v291 = vsel %vm288, %v289, %v290
        %v292 = vrot.slane %v276, 1
        %v293 = vsel %vm288, %v290, %v292
        %v294 = vrot.slane %v273, 1
        %v295 = vrot.slane %v245, 1
        %v296 = vsel %vm288, %v294, %v295
        %v297 = vrot.slane %v277, 1
        %v298 = vsel %vm288, %v295, %v297
        %v299 = vrot.slane %v274, 1
        %v300 = vrot.slane %v248, 1
        %v301 = vsel %vm288, %v299, %v300
        %v302 = vrot.slane %v278, 1
        %v303 = vsel %vm288, %v300, %v302
        %v304 = vrot.slane %v275, 1
        %v305 = vrot.slane %v251, 1
        %v306 = vsel %vm288, %v304, %v305
        %v307 = vrot.slane %v279, 1
        %v308 = vsel %vm288, %v305, %v307
        %v317 = vadd.f32 %v272, %v291
        %v318 = vadd.f32 %v242, %v293
        %v319 = vadd.f32 %v273, %v296
        %v320 = vadd.f32 %v245, %v298
        %v321 = vadd.f32 %v274, %v301
        %v322 = vadd.f32 %v248, %v303
        %v323 = vadd.f32 %v275, %v306
        %v324 = vadd.f32 %v251, %v308
        %vm325 = vcmask 1045504
        %v326 = vrot.slane %v272, 2
        %v327 = vrot.slane %v242, 2
        %v328 = vsel %vm325, %v326, %v327
        %v329 = vrot.slane %v276, 2
        %v330 = vsel %vm325, %v327, %v329
        %v331 = vrot.slane %v273, 2
        %v332 = vrot.slane %v245, 2
        %v333 = vsel %vm325, %v331, %v332
        %v334 = vrot.slane %v277, 2
        %v335 = vsel %vm325, %v332, %v334
        %v336 = vrot.slane %v274, 2
        %v337 = vrot.slane %v248, 2
        %v338 = vsel %vm325, %v336, %v337
        %v339 = vrot.slane %v278, 2
        %v340 = vsel %vm325, %v337, %v339
        %v341 = vrot.slane %v275, 2
        %v342 = vrot.slane %v251, 2
        %v343 = vsel %vm325, %v341, %v342
        %v344 = vrot.slane %v279, 2
        %v345 = vsel %vm325, %v342, %v344
        %v354 = vadd.f32 %v317, %v328
        %v355 = vadd.f32 %v318, %v330
        %v356 = vadd.f32 %v319, %v333
        %v357 = vadd.f32 %v320, %v335
        %v358 = vadd.f32 %v321, %v338
        %v359 = vadd.f32 %v322, %v340
        %v360 = vadd.f32 %v323, %v343
        %v361 = vadd.f32 %v324, %v345
        %370 = vrot.lane.b32.xlu0 %v354, 127
        %v371 = vpop.permute.xlu0 %370
        %372 = vrot.lane.b32.xlu0 %v355, 127
        %v373 = vpop.permute.xlu0 %372
        %374 = vrot.lane.b32.xlu0 %v356, 127
        %v375 = vpop.permute.xlu0 %374
        %376 = vrot.lane.b32.xlu0 %v357, 127
        %v377 = vpop.permute.xlu0 %376
        %378 = vrot.lane.b32.xlu0 %v358, 127
        %v379 = vpop.permute.xlu0 %378
        %380 = vrot.lane.b32.xlu0 %v359, 127
        %v381 = vpop.permute.xlu0 %380
        %382 = vrot.lane.b32.xlu0 %v360, 127
        %v383 = vpop.permute.xlu0 %382
        %384 = vrot.lane.b32.xlu0 %v361, 127
        %v385 = vpop.permute.xlu0 %384
        %394 = vrot.lane.b32.xlu0 %v354, 1
        %v395 = vpop.permute.xlu0 %394
        %396 = vrot.lane.b32.xlu0 %v355, 1
        %v397 = vpop.permute.xlu0 %396
        %398 = vrot.lane.b32.xlu0 %v356, 1
        %v399 = vpop.permute.xlu0 %398
        %400 = vrot.lane.b32.xlu0 %v357, 1
        %v401 = vpop.permute.xlu0 %400
        %402 = vrot.lane.b32.xlu0 %v358, 1
        %v403 = vpop.permute.xlu0 %402
        %404 = vrot.lane.b32.xlu0 %v359, 1
        %v405 = vpop.permute.xlu0 %404
        %406 = vrot.lane.b32.xlu0 %v360, 1
        %v407 = vpop.permute.xlu0 %406
        %408 = vrot.lane.b32.xlu0 %v361, 1
        %v409 = vpop.permute.xlu0 %408
        %418 = vrot.lane.b32.xlu0 %v354, 3
        %v419 = vpop.permute.xlu0 %418
        %420 = vrot.lane.b32.xlu0 %v355, 3
        %v421 = vpop.permute.xlu0 %420
        %422 = vrot.lane.b32.xlu0 %v356, 3
        %v423 = vpop.permute.xlu0 %422
        %424 = vrot.lane.b32.xlu0 %v357, 3
        %v425 = vpop.permute.xlu0 %424
        %426 = vrot.lane.b32.xlu0 %v358, 3
        %v427 = vpop.permute.xlu0 %426
        %428 = vrot.lane.b32.xlu0 %v359, 3
        %v429 = vpop.permute.xlu0 %428
        %430 = vrot.lane.b32.xlu0 %v360, 3
        %v431 = vpop.permute.xlu0 %430
        %432 = vrot.lane.b32.xlu0 %v361, 3
        %v433 = vpop.permute.xlu0 %432
        %vm442 = vcmask 7168
        %v443 = vsel %vm442, %v371, %v395
        %v444 = vsel %vm442, %v373, %v397
        %v445 = vsel %vm442, %v375, %v399
        %v446 = vsel %vm442, %v377, %v401
        %v447 = vsel %vm442, %v379, %v403
        %v448 = vsel %vm442, %v381, %v405
        %v449 = vsel %vm442, %v383, %v407
        %v450 = vsel %vm442, %v385, %v409
        %vm451 = vcmask 138240
        %v452 = vsel %vm451, %v443, %v419
        %v453 = vsel %vm451, %v444, %v421
        %v454 = vsel %vm451, %v445, %v423
        %v455 = vsel %vm451, %v446, %v425
        %v456 = vsel %vm451, %v447, %v427
        %v457 = vsel %vm451, %v448, %v429
        %v458 = vsel %vm451, %v449, %v431
        %v459 = vsel %vm451, %v450, %v433
        %468 = vrot.lane.b32.xlu0 %v452, 127
        %v469 = vpop.permute.xlu0 %468
        %470 = vrot.lane.b32.xlu0 %v453, 127
        %v471 = vpop.permute.xlu0 %470
        %472 = vrot.lane.b32.xlu0 %v454, 127
        %v473 = vpop.permute.xlu0 %472
        %474 = vrot.lane.b32.xlu0 %v455, 127
        %v475 = vpop.permute.xlu0 %474
        %476 = vrot.lane.b32.xlu0 %v456, 127
        %v477 = vpop.permute.xlu0 %476
        %478 = vrot.lane.b32.xlu0 %v457, 127
        %v479 = vpop.permute.xlu0 %478
        %480 = vrot.lane.b32.xlu0 %v458, 127
        %v481 = vpop.permute.xlu0 %480
        %482 = vrot.lane.b32.xlu0 %v459, 127
        %v483 = vpop.permute.xlu0 %482
        %v492 = vadd.f32 %v452, %v469
        %v493 = vadd.f32 %v453, %v471
        %v494 = vadd.f32 %v454, %v473
        %v495 = vadd.f32 %v455, %v475
        %v496 = vadd.f32 %v456, %v477
        %v497 = vadd.f32 %v457, %v479
        %v498 = vadd.f32 %v458, %v481
        %v499 = vadd.f32 %v459, %v483
        %500 = vrot.lane.b32.xlu0 %v452, 126
        %v501 = vpop.permute.xlu0 %500
        %502 = vrot.lane.b32.xlu0 %v453, 126
        %v503 = vpop.permute.xlu0 %502
        %504 = vrot.lane.b32.xlu0 %v454, 126
        %v505 = vpop.permute.xlu0 %504
        %506 = vrot.lane.b32.xlu0 %v455, 126
        %v507 = vpop.permute.xlu0 %506
        %508 = vrot.lane.b32.xlu0 %v456, 126
        %v509 = vpop.permute.xlu0 %508
        %510 = vrot.lane.b32.xlu0 %v457, 126
        %v511 = vpop.permute.xlu0 %510
        %512 = vrot.lane.b32.xlu0 %v458, 126
        %v513 = vpop.permute.xlu0 %512
        %514 = vrot.lane.b32.xlu0 %v459, 126
        %v515 = vpop.permute.xlu0 %514
        %v524 = vadd.f32 %v492, %v501
        %v525 = vadd.f32 %v493, %v503
        %v526 = vadd.f32 %v494, %v505
        %v527 = vadd.f32 %v495, %v507
        %v528 = vadd.f32 %v496, %v509
        %v529 = vadd.f32 %v497, %v511
        %v530 = vadd.f32 %v498, %v513
        %v531 = vadd.f32 %v499, %v515
        %v532 = vmul.f32 %v524, 0.11111111
        %v533 = vmul.f32 %v525, 0.11111111
        %v534 = vmul.f32 %v526, 0.11111111
        %v535 = vmul.f32 %v527, 0.11111111
        %v536 = vmul.f32 %v528, 0.11111111
        %v537 = vmul.f32 %v529, 0.11111111
        %v538 = vmul.f32 %v530, 0.11111111
        %v539 = vmul.f32 %v531, 0.11111111
        %v544 = vrot.slane %v215, 1
        %v545 = vrot.slane %v217, 1
        %v546 = vrot.slane %v219, 1
        %v547 = vrot.slane %v221, 1
        %v556 = vrot.slane %v215, 7
        %v557 = vrot.slane %v216, 7
        %v558 = vsel %vm239, %v556, %v557
        %v559 = vrot.slane %v217, 7
        %v560 = vrot.slane %v218, 7
        %v561 = vsel %vm239, %v559, %v560
        %v562 = vrot.slane %v219, 7
        %v563 = vrot.slane %v220, 7
        %v564 = vsel %vm239, %v562, %v563
        %v565 = vrot.slane %v221, 7
        %v566 = vrot.slane %v222, 7
        %v567 = vsel %vm239, %v565, %v566
        %v580 = vrot.slane %v216, 5
        %v581 = vrot.slane %v218, 5
        %v582 = vrot.slane %v220, 5
        %v583 = vrot.slane %v222, 5
        %v588 = vsel %vm239, %v544, %v556
        %v589 = vsel %vm239, %v545, %v559
        %v590 = vsel %vm239, %v546, %v562
        %v591 = vsel %vm239, %v547, %v565
        %v592 = vsel %vm239, %v557, %v580
        %v593 = vsel %vm239, %v560, %v581
        %v594 = vsel %vm239, %v563, %v582
        %v595 = vsel %vm239, %v566, %v583
        %v604 = vrot.slane %v588, 1
        %v605 = vrot.slane %v558, 1
        %v606 = vsel %vm288, %v604, %v605
        %v607 = vrot.slane %v592, 1
        %v608 = vsel %vm288, %v605, %v607
        %v609 = vrot.slane %v589, 1
        %v610 = vrot.slane %v561, 1
        %v611 = vsel %vm288, %v609, %v610
        %v612 = vrot.slane %v593, 1
        %v613 = vsel %vm288, %v610, %v612
        %v614 = vrot.slane %v590, 1
        %v615 = vrot.slane %v564, 1
        %v616 = vsel %vm288, %v614, %v615
        %v617 = vrot.slane %v594, 1
        %v618 = vsel %vm288, %v615, %v617
        %v619 = vrot.slane %v591, 1
        %v620 = vrot.slane %v567, 1
        %v621 = vsel %vm288, %v619, %v620
        %v622 = vrot.slane %v595, 1
        %v623 = vsel %vm288, %v620, %v622
        %v632 = vadd.f32 %v588, %v606
        %v633 = vadd.f32 %v558, %v608
        %v634 = vadd.f32 %v589, %v611
        %v635 = vadd.f32 %v561, %v613
        %v636 = vadd.f32 %v590, %v616
        %v637 = vadd.f32 %v564, %v618
        %v638 = vadd.f32 %v591, %v621
        %v639 = vadd.f32 %v567, %v623
        %v640 = vrot.slane %v588, 2
        %v641 = vrot.slane %v558, 2
        %v642 = vsel %vm325, %v640, %v641
        %v643 = vrot.slane %v592, 2
        %v644 = vsel %vm325, %v641, %v643
        %v645 = vrot.slane %v589, 2
        %v646 = vrot.slane %v561, 2
        %v647 = vsel %vm325, %v645, %v646
        %v648 = vrot.slane %v593, 2
        %v649 = vsel %vm325, %v646, %v648
        %v650 = vrot.slane %v590, 2
        %v651 = vrot.slane %v564, 2
        %v652 = vsel %vm325, %v650, %v651
        %v653 = vrot.slane %v594, 2
        %v654 = vsel %vm325, %v651, %v653
        %v655 = vrot.slane %v591, 2
        %v656 = vrot.slane %v567, 2
        %v657 = vsel %vm325, %v655, %v656
        %v658 = vrot.slane %v595, 2
        %v659 = vsel %vm325, %v656, %v658
        %v668 = vadd.f32 %v632, %v642
        %v669 = vadd.f32 %v633, %v644
        %v670 = vadd.f32 %v634, %v647
        %v671 = vadd.f32 %v635, %v649
        %v672 = vadd.f32 %v636, %v652
        %v673 = vadd.f32 %v637, %v654
        %v674 = vadd.f32 %v638, %v657
        %v675 = vadd.f32 %v639, %v659
        %684 = vrot.lane.b32.xlu0 %v668, 127
        %v685 = vpop.permute.xlu0 %684
        %686 = vrot.lane.b32.xlu0 %v669, 127
        %v687 = vpop.permute.xlu0 %686
        %688 = vrot.lane.b32.xlu0 %v670, 127
        %v689 = vpop.permute.xlu0 %688
        %690 = vrot.lane.b32.xlu0 %v671, 127
        %v691 = vpop.permute.xlu0 %690
        %692 = vrot.lane.b32.xlu0 %v672, 127
        %v693 = vpop.permute.xlu0 %692
        %694 = vrot.lane.b32.xlu0 %v673, 127
        %v695 = vpop.permute.xlu0 %694
        %696 = vrot.lane.b32.xlu0 %v674, 127
        %v697 = vpop.permute.xlu0 %696
        %698 = vrot.lane.b32.xlu0 %v675, 127
        %v699 = vpop.permute.xlu0 %698
        %708 = vrot.lane.b32.xlu0 %v668, 1
        %v709 = vpop.permute.xlu0 %708
        %710 = vrot.lane.b32.xlu0 %v669, 1
        %v711 = vpop.permute.xlu0 %710
        %712 = vrot.lane.b32.xlu0 %v670, 1
        %v713 = vpop.permute.xlu0 %712
        %714 = vrot.lane.b32.xlu0 %v671, 1
        %v715 = vpop.permute.xlu0 %714
        %716 = vrot.lane.b32.xlu0 %v672, 1
        %v717 = vpop.permute.xlu0 %716
        %718 = vrot.lane.b32.xlu0 %v673, 1
        %v719 = vpop.permute.xlu0 %718
        %720 = vrot.lane.b32.xlu0 %v674, 1
        %v721 = vpop.permute.xlu0 %720
        %722 = vrot.lane.b32.xlu0 %v675, 1
        %v723 = vpop.permute.xlu0 %722
        %732 = vrot.lane.b32.xlu0 %v668, 3
        %v733 = vpop.permute.xlu0 %732
        %734 = vrot.lane.b32.xlu0 %v669, 3
        %v735 = vpop.permute.xlu0 %734
        %736 = vrot.lane.b32.xlu0 %v670, 3
        %v737 = vpop.permute.xlu0 %736
        %738 = vrot.lane.b32.xlu0 %v671, 3
        %v739 = vpop.permute.xlu0 %738
        %740 = vrot.lane.b32.xlu0 %v672, 3
        %v741 = vpop.permute.xlu0 %740
        %742 = vrot.lane.b32.xlu0 %v673, 3
        %v743 = vpop.permute.xlu0 %742
        %744 = vrot.lane.b32.xlu0 %v674, 3
        %v745 = vpop.permute.xlu0 %744
        %746 = vrot.lane.b32.xlu0 %v675, 3
        %v747 = vpop.permute.xlu0 %746
        %v756 = vsel %vm442, %v685, %v709
        %v757 = vsel %vm442, %v687, %v711
        %v758 = vsel %vm442, %v689, %v713
        %v759 = vsel %vm442, %v691, %v715
        %v760 = vsel %vm442, %v693, %v717
        %v761 = vsel %vm442, %v695, %v719
        %v762 = vsel %vm442, %v697, %v721
        %v763 = vsel %vm442, %v699, %v723
        %v764 = vsel %vm451, %v756, %v733
        %v765 = vsel %vm451, %v757, %v735
        %v766 = vsel %vm451, %v758, %v737
        %v767 = vsel %vm451, %v759, %v739
        %v768 = vsel %vm451, %v760, %v741
        %v769 = vsel %vm451, %v761, %v743
        %v770 = vsel %vm451, %v762, %v745
        %v771 = vsel %vm451, %v763, %v747
        %780 = vrot.lane.b32.xlu0 %v764, 127
        %v781 = vpop.permute.xlu0 %780
        %782 = vrot.lane.b32.xlu0 %v765, 127
        %v783 = vpop.permute.xlu0 %782
        %784 = vrot.lane.b32.xlu0 %v766, 127
        %v785 = vpop.permute.xlu0 %784
        %786 = vrot.lane.b32.xlu0 %v767, 127
        %v787 = vpop.permute.xlu0 %786
        %788 = vrot.lane.b32.xlu0 %v768, 127
        %v789 = vpop.permute.xlu0 %788
        %790 = vrot.lane.b32.xlu0 %v769, 127
        %v791 = vpop.permute.xlu0 %790
        %792 = vrot.lane.b32.xlu0 %v770, 127
        %v793 = vpop.permute.xlu0 %792
        %794 = vrot.lane.b32.xlu0 %v771, 127
        %v795 = vpop.permute.xlu0 %794
        %v804 = vadd.f32 %v764, %v781
        %v805 = vadd.f32 %v765, %v783
        %v806 = vadd.f32 %v766, %v785
        %v807 = vadd.f32 %v767, %v787
        %v808 = vadd.f32 %v768, %v789
        %v809 = vadd.f32 %v769, %v791
        %v810 = vadd.f32 %v770, %v793
        %v811 = vadd.f32 %v771, %v795
        %812 = vrot.lane.b32.xlu0 %v764, 126
        %v813 = vpop.permute.xlu0 %812
        %814 = vrot.lane.b32.xlu0 %v765, 126
        %v815 = vpop.permute.xlu0 %814
        %816 = vrot.lane.b32.xlu0 %v766, 126
        %v817 = vpop.permute.xlu0 %816
        %818 = vrot.lane.b32.xlu0 %v767, 126
        %v819 = vpop.permute.xlu0 %818
        %820 = vrot.lane.b32.xlu0 %v768, 126
        %v821 = vpop.permute.xlu0 %820
        %822 = vrot.lane.b32.xlu0 %v769, 126
        %v823 = vpop.permute.xlu0 %822
        %824 = vrot.lane.b32.xlu0 %v770, 126
        %v825 = vpop.permute.xlu0 %824
        %826 = vrot.lane.b32.xlu0 %v771, 126
        %v827 = vpop.permute.xlu0 %826
        %v836 = vadd.f32 %v804, %v813
        %v837 = vadd.f32 %v805, %v815
        %v838 = vadd.f32 %v806, %v817
        %v839 = vadd.f32 %v807, %v819
        %v840 = vadd.f32 %v808, %v821
        %v841 = vadd.f32 %v809, %v823
        %v842 = vadd.f32 %v810, %v825
        %v843 = vadd.f32 %v811, %v827
        %v844 = vmul.f32 %v836, 0.11111111
        %v845 = vmul.f32 %v837, 0.11111111
        %v846 = vmul.f32 %v838, 0.11111111
        %v847 = vmul.f32 %v839, 0.11111111
        %v848 = vmul.f32 %v840, 0.11111111
        %v849 = vmul.f32 %v841, 0.11111111
        %v850 = vmul.f32 %v842, 0.11111111
        %v851 = vmul.f32 %v843, 0.11111111
        %v852 = vmul.f32 %v207, %v207
        %v853 = vmul.f32 %v208, %v208
        %v854 = vmul.f32 %v209, %v209
        %v855 = vmul.f32 %v210, %v210
        %v856 = vmul.f32 %v211, %v211
        %v857 = vmul.f32 %v212, %v212
        %v858 = vmul.f32 %v213, %v213
        %v859 = vmul.f32 %v214, %v214
        %v864 = vrot.slane %v852, 1
        %v865 = vrot.slane %v854, 1
        %v866 = vrot.slane %v856, 1
        %v867 = vrot.slane %v858, 1
        %v876 = vrot.slane %v852, 7
        %v877 = vrot.slane %v853, 7
        %v878 = vsel %vm239, %v876, %v877
        %v879 = vrot.slane %v854, 7
        %v880 = vrot.slane %v855, 7
        %v881 = vsel %vm239, %v879, %v880
        %v882 = vrot.slane %v856, 7
        %v883 = vrot.slane %v857, 7
        %v884 = vsel %vm239, %v882, %v883
        %v885 = vrot.slane %v858, 7
        %v886 = vrot.slane %v859, 7
        %v887 = vsel %vm239, %v885, %v886
        %v900 = vrot.slane %v853, 5
        %v901 = vrot.slane %v855, 5
        %v902 = vrot.slane %v857, 5
        %v903 = vrot.slane %v859, 5
        %v908 = vsel %vm239, %v864, %v876
        %v909 = vsel %vm239, %v865, %v879
        %v910 = vsel %vm239, %v866, %v882
        %v911 = vsel %vm239, %v867, %v885
        %v912 = vsel %vm239, %v877, %v900
        %v913 = vsel %vm239, %v880, %v901
        %v914 = vsel %vm239, %v883, %v902
        %v915 = vsel %vm239, %v886, %v903
        %v924 = vrot.slane %v908, 1
        %v925 = vrot.slane %v878, 1
        %v926 = vsel %vm288, %v924, %v925
        %v927 = vrot.slane %v912, 1
        %v928 = vsel %vm288, %v925, %v927
        %v929 = vrot.slane %v909, 1
        %v930 = vrot.slane %v881, 1
        %v931 = vsel %vm288, %v929, %v930
        %v932 = vrot.slane %v913, 1
        %v933 = vsel %vm288, %v930, %v932
        %v934 = vrot.slane %v910, 1
        %v935 = vrot.slane %v884, 1
        %v936 = vsel %vm288, %v934, %v935
        %v937 = vrot.slane %v914, 1
        %v938 = vsel %vm288, %v935, %v937
        %v939 = vrot.slane %v911, 1
        %v940 = vrot.slane %v887, 1
        %v941 = vsel %vm288, %v939, %v940
        %v942 = vrot.slane %v915, 1
        %v943 = vsel %vm288, %v940, %v942
        %v952 = vadd.f32 %v908, %v926
        %v953 = vadd.f32 %v878, %v928
        %v954 = vadd.f32 %v909, %v931
        %v955 = vadd.f32 %v881, %v933
        %v956 = vadd.f32 %v910, %v936
        %v957 = vadd.f32 %v884, %v938
        %v958 = vadd.f32 %v911, %v941
        %v959 = vadd.f32 %v887, %v943
        %v960 = vrot.slane %v908, 2
        %v961 = vrot.slane %v878, 2
        %v962 = vsel %vm325, %v960, %v961
        %v963 = vrot.slane %v912, 2
        %v964 = vsel %vm325, %v961, %v963
        %v965 = vrot.slane %v909, 2
        %v966 = vrot.slane %v881, 2
        %v967 = vsel %vm325, %v965, %v966
        %v968 = vrot.slane %v913, 2
        %v969 = vsel %vm325, %v966, %v968
        %v970 = vrot.slane %v910, 2
        %v971 = vrot.slane %v884, 2
        %v972 = vsel %vm325, %v970, %v971
        %v973 = vrot.slane %v914, 2
        %v974 = vsel %vm325, %v971, %v973
        %v975 = vrot.slane %v911, 2
        %v976 = vrot.slane %v887, 2
        %v977 = vsel %vm325, %v975, %v976
        %v978 = vrot.slane %v915, 2
        %v979 = vsel %vm325, %v976, %v978
        %v988 = vadd.f32 %v952, %v962
        %v989 = vadd.f32 %v953, %v964
        %v990 = vadd.f32 %v954, %v967
        %v991 = vadd.f32 %v955, %v969
        %v992 = vadd.f32 %v956, %v972
        %v993 = vadd.f32 %v957, %v974
        %v994 = vadd.f32 %v958, %v977
        %v995 = vadd.f32 %v959, %v979
        %1004 = vrot.lane.b32.xlu0 %v988, 127
        %v1005 = vpop.permute.xlu0 %1004
        %1006 = vrot.lane.b32.xlu0 %v989, 127
        %v1007 = vpop.permute.xlu0 %1006
        %1008 = vrot.lane.b32.xlu0 %v990, 127
        %v1009 = vpop.permute.xlu0 %1008
        %1010 = vrot.lane.b32.xlu0 %v991, 127
        %v1011 = vpop.permute.xlu0 %1010
        %1012 = vrot.lane.b32.xlu0 %v992, 127
        %v1013 = vpop.permute.xlu0 %1012
        %1014 = vrot.lane.b32.xlu0 %v993, 127
        %v1015 = vpop.permute.xlu0 %1014
        %1016 = vrot.lane.b32.xlu0 %v994, 127
        %v1017 = vpop.permute.xlu0 %1016
        %1018 = vrot.lane.b32.xlu0 %v995, 127
        %v1019 = vpop.permute.xlu0 %1018
        %1028 = vrot.lane.b32.xlu0 %v988, 1
        %v1029 = vpop.permute.xlu0 %1028
        %1030 = vrot.lane.b32.xlu0 %v989, 1
        %v1031 = vpop.permute.xlu0 %1030
        %1032 = vrot.lane.b32.xlu0 %v990, 1
        %v1033 = vpop.permute.xlu0 %1032
        %1034 = vrot.lane.b32.xlu0 %v991, 1
        %v1035 = vpop.permute.xlu0 %1034
        %1036 = vrot.lane.b32.xlu0 %v992, 1
        %v1037 = vpop.permute.xlu0 %1036
        %1038 = vrot.lane.b32.xlu0 %v993, 1
        %v1039 = vpop.permute.xlu0 %1038
        %1040 = vrot.lane.b32.xlu0 %v994, 1
        %v1041 = vpop.permute.xlu0 %1040
        %1042 = vrot.lane.b32.xlu0 %v995, 1
        %v1043 = vpop.permute.xlu0 %1042
        %1052 = vrot.lane.b32.xlu0 %v988, 3
        %v1053 = vpop.permute.xlu0 %1052
        %1054 = vrot.lane.b32.xlu0 %v989, 3
        %v1055 = vpop.permute.xlu0 %1054
        %1056 = vrot.lane.b32.xlu0 %v990, 3
        %v1057 = vpop.permute.xlu0 %1056
        %1058 = vrot.lane.b32.xlu0 %v991, 3
        %v1059 = vpop.permute.xlu0 %1058
        %1060 = vrot.lane.b32.xlu0 %v992, 3
        %v1061 = vpop.permute.xlu0 %1060
        %1062 = vrot.lane.b32.xlu0 %v993, 3
        %v1063 = vpop.permute.xlu0 %1062
        %1064 = vrot.lane.b32.xlu0 %v994, 3
        %v1065 = vpop.permute.xlu0 %1064
        %1066 = vrot.lane.b32.xlu0 %v995, 3
        %v1067 = vpop.permute.xlu0 %1066
        %v1076 = vsel %vm442, %v1005, %v1029
        %v1077 = vsel %vm442, %v1007, %v1031
        %v1078 = vsel %vm442, %v1009, %v1033
        %v1079 = vsel %vm442, %v1011, %v1035
        %v1080 = vsel %vm442, %v1013, %v1037
        %v1081 = vsel %vm442, %v1015, %v1039
        %v1082 = vsel %vm442, %v1017, %v1041
        %v1083 = vsel %vm442, %v1019, %v1043
        %v1084 = vsel %vm451, %v1076, %v1053
        %v1085 = vsel %vm451, %v1077, %v1055
        %v1086 = vsel %vm451, %v1078, %v1057
        %v1087 = vsel %vm451, %v1079, %v1059
        %v1088 = vsel %vm451, %v1080, %v1061
        %v1089 = vsel %vm451, %v1081, %v1063
        %v1090 = vsel %vm451, %v1082, %v1065
        %v1091 = vsel %vm451, %v1083, %v1067
        %1100 = vrot.lane.b32.xlu0 %v1084, 127
        %v1101 = vpop.permute.xlu0 %1100
        %1102 = vrot.lane.b32.xlu0 %v1085, 127
        %v1103 = vpop.permute.xlu0 %1102
        %1104 = vrot.lane.b32.xlu0 %v1086, 127
        %v1105 = vpop.permute.xlu0 %1104
        %1106 = vrot.lane.b32.xlu0 %v1087, 127
        %v1107 = vpop.permute.xlu0 %1106
        %1108 = vrot.lane.b32.xlu0 %v1088, 127
        %v1109 = vpop.permute.xlu0 %1108
        %1110 = vrot.lane.b32.xlu0 %v1089, 127
        %v1111 = vpop.permute.xlu0 %1110
        %1112 = vrot.lane.b32.xlu0 %v1090, 127
        %v1113 = vpop.permute.xlu0 %1112
        %1114 = vrot.lane.b32.xlu0 %v1091, 127
        %v1115 = vpop.permute.xlu0 %1114
        %v1124 = vadd.f32 %v1084, %v1101
        %v1125 = vadd.f32 %v1085, %v1103
        %v1126 = vadd.f32 %v1086, %v1105
        %v1127 = vadd.f32 %v1087, %v1107
        %v1128 = vadd.f32 %v1088, %v1109
        %v1129 = vadd.f32 %v1089, %v1111
        %v1130 = vadd.f32 %v1090, %v1113
        %v1131 = vadd.f32 %v1091, %v1115
        %1132 = vrot.lane.b32.xlu0 %v1084, 126
        %v1133 = vpop.permute.xlu0 %1132
        %1134 = vrot.lane.b32.xlu0 %v1085, 126
        %v1135 = vpop.permute.xlu0 %1134
        %1136 = vrot.lane.b32.xlu0 %v1086, 126
        %v1137 = vpop.permute.xlu0 %1136
        %1138 = vrot.lane.b32.xlu0 %v1087, 126
        %v1139 = vpop.permute.xlu0 %1138
        %1140 = vrot.lane.b32.xlu0 %v1088, 126
        %v1141 = vpop.permute.xlu0 %1140
        %1142 = vrot.lane.b32.xlu0 %v1089, 126
        %v1143 = vpop.permute.xlu0 %1142
        %1144 = vrot.lane.b32.xlu0 %v1090, 126
        %v1145 = vpop.permute.xlu0 %1144
        %1146 = vrot.lane.b32.xlu0 %v1091, 126
        %v1147 = vpop.permute.xlu0 %1146
        %v1156 = vadd.f32 %v1124, %v1133
        %v1157 = vadd.f32 %v1125, %v1135
        %v1158 = vadd.f32 %v1126, %v1137
        %v1159 = vadd.f32 %v1127, %v1139
        %v1160 = vadd.f32 %v1128, %v1141
        %v1161 = vadd.f32 %v1129, %v1143
        %v1162 = vadd.f32 %v1130, %v1145
        %v1163 = vadd.f32 %v1131, %v1147
        %v1164 = vmul.f32 %v1156, 0.11111111
        %v1165 = vmul.f32 %v1157, 0.11111111
        %v1166 = vmul.f32 %v1158, 0.11111111
        %v1167 = vmul.f32 %v1159, 0.11111111
        %v1168 = vmul.f32 %v1160, 0.11111111
        %v1169 = vmul.f32 %v1161, 0.11111111
        %v1170 = vmul.f32 %v1162, 0.11111111
        %v1171 = vmul.f32 %v1163, 0.11111111
        %v1172 = vmul.f32 %v532, %v532
        %v1173 = vmul.f32 %v533, %v533
        %v1174 = vmul.f32 %v534, %v534
        %v1175 = vmul.f32 %v535, %v535
        %v1176 = vmul.f32 %v536, %v536
        %v1177 = vmul.f32 %v537, %v537
        %v1178 = vmul.f32 %v538, %v538
        %v1179 = vmul.f32 %v539, %v539
        %v1180 = vsub.f32 %v1164, %v1172
        %v1181 = vsub.f32 %v1165, %v1173
        %v1182 = vsub.f32 %v1166, %v1174
        %v1183 = vsub.f32 %v1167, %v1175
        %v1184 = vsub.f32 %v1168, %v1176
        %v1185 = vsub.f32 %v1169, %v1177
        %v1186 = vsub.f32 %v1170, %v1178
        %v1187 = vsub.f32 %v1171, %v1179
        %v1188 = vmul.f32 %v215, %v215
        %v1189 = vmul.f32 %v216, %v216
        %v1190 = vmul.f32 %v217, %v217
        %v1191 = vmul.f32 %v218, %v218
        %v1192 = vmul.f32 %v219, %v219
        %v1193 = vmul.f32 %v220, %v220
        %v1194 = vmul.f32 %v221, %v221
        %v1195 = vmul.f32 %v222, %v222
        %v1200 = vrot.slane %v1188, 1
        %v1201 = vrot.slane %v1190, 1
        %v1202 = vrot.slane %v1192, 1
        %v1203 = vrot.slane %v1194, 1
        %v1212 = vrot.slane %v1188, 7
        %v1213 = vrot.slane %v1189, 7
        %v1214 = vsel %vm239, %v1212, %v1213
        %v1215 = vrot.slane %v1190, 7
        %v1216 = vrot.slane %v1191, 7
        %v1217 = vsel %vm239, %v1215, %v1216
        %v1218 = vrot.slane %v1192, 7
        %v1219 = vrot.slane %v1193, 7
        %v1220 = vsel %vm239, %v1218, %v1219
        %v1221 = vrot.slane %v1194, 7
        %v1222 = vrot.slane %v1195, 7
        %v1223 = vsel %vm239, %v1221, %v1222
        %v1236 = vrot.slane %v1189, 5
        %v1237 = vrot.slane %v1191, 5
        %v1238 = vrot.slane %v1193, 5
        %v1239 = vrot.slane %v1195, 5
        %v1244 = vsel %vm239, %v1200, %v1212
        %v1245 = vsel %vm239, %v1201, %v1215
        %v1246 = vsel %vm239, %v1202, %v1218
        %v1247 = vsel %vm239, %v1203, %v1221
        %v1248 = vsel %vm239, %v1213, %v1236
        %v1249 = vsel %vm239, %v1216, %v1237
        %v1250 = vsel %vm239, %v1219, %v1238
        %v1251 = vsel %vm239, %v1222, %v1239
        %v1260 = vrot.slane %v1244, 1
        %v1261 = vrot.slane %v1214, 1
        %v1262 = vsel %vm288, %v1260, %v1261
        %v1263 = vrot.slane %v1248, 1
        %v1264 = vsel %vm288, %v1261, %v1263
        %v1265 = vrot.slane %v1245, 1
        %v1266 = vrot.slane %v1217, 1
        %v1267 = vsel %vm288, %v1265, %v1266
        %v1268 = vrot.slane %v1249, 1
        %v1269 = vsel %vm288, %v1266, %v1268
        %v1270 = vrot.slane %v1246, 1
        %v1271 = vrot.slane %v1220, 1
        %v1272 = vsel %vm288, %v1270, %v1271
        %v1273 = vrot.slane %v1250, 1
        %v1274 = vsel %vm288, %v1271, %v1273
        %v1275 = vrot.slane %v1247, 1
        %v1276 = vrot.slane %v1223, 1
        %v1277 = vsel %vm288, %v1275, %v1276
        %v1278 = vrot.slane %v1251, 1
        %v1279 = vsel %vm288, %v1276, %v1278
        %v1288 = vadd.f32 %v1244, %v1262
        %v1289 = vadd.f32 %v1214, %v1264
        %v1290 = vadd.f32 %v1245, %v1267
        %v1291 = vadd.f32 %v1217, %v1269
        %v1292 = vadd.f32 %v1246, %v1272
        %v1293 = vadd.f32 %v1220, %v1274
        %v1294 = vadd.f32 %v1247, %v1277
        %v1295 = vadd.f32 %v1223, %v1279
        %v1296 = vrot.slane %v1244, 2
        %v1297 = vrot.slane %v1214, 2
        %v1298 = vsel %vm325, %v1296, %v1297
        %v1299 = vrot.slane %v1248, 2
        %v1300 = vsel %vm325, %v1297, %v1299
        %v1301 = vrot.slane %v1245, 2
        %v1302 = vrot.slane %v1217, 2
        %v1303 = vsel %vm325, %v1301, %v1302
        %v1304 = vrot.slane %v1249, 2
        %v1305 = vsel %vm325, %v1302, %v1304
        %v1306 = vrot.slane %v1246, 2
        %v1307 = vrot.slane %v1220, 2
        %v1308 = vsel %vm325, %v1306, %v1307
        %v1309 = vrot.slane %v1250, 2
        %v1310 = vsel %vm325, %v1307, %v1309
        %v1311 = vrot.slane %v1247, 2
        %v1312 = vrot.slane %v1223, 2
        %v1313 = vsel %vm325, %v1311, %v1312
        %v1314 = vrot.slane %v1251, 2
        %v1315 = vsel %vm325, %v1312, %v1314
        %v1324 = vadd.f32 %v1288, %v1298
        %v1325 = vadd.f32 %v1289, %v1300
        %v1326 = vadd.f32 %v1290, %v1303
        %v1327 = vadd.f32 %v1291, %v1305
        %v1328 = vadd.f32 %v1292, %v1308
        %v1329 = vadd.f32 %v1293, %v1310
        %v1330 = vadd.f32 %v1294, %v1313
        %v1331 = vadd.f32 %v1295, %v1315
        %1340 = vrot.lane.b32.xlu0 %v1324, 127
        %v1341 = vpop.permute.xlu0 %1340
        %1342 = vrot.lane.b32.xlu0 %v1325, 127
        %v1343 = vpop.permute.xlu0 %1342
        %1344 = vrot.lane.b32.xlu0 %v1326, 127
        %v1345 = vpop.permute.xlu0 %1344
        %1346 = vrot.lane.b32.xlu0 %v1327, 127
        %v1347 = vpop.permute.xlu0 %1346
        %1348 = vrot.lane.b32.xlu0 %v1328, 127
        %v1349 = vpop.permute.xlu0 %1348
        %1350 = vrot.lane.b32.xlu0 %v1329, 127
        %v1351 = vpop.permute.xlu0 %1350
        %1352 = vrot.lane.b32.xlu0 %v1330, 127
        %v1353 = vpop.permute.xlu0 %1352
        %1354 = vrot.lane.b32.xlu0 %v1331, 127
        %v1355 = vpop.permute.xlu0 %1354
        %1364 = vrot.lane.b32.xlu0 %v1324, 1
        %v1365 = vpop.permute.xlu0 %1364
        %1366 = vrot.lane.b32.xlu0 %v1325, 1
        %v1367 = vpop.permute.xlu0 %1366
        %1368 = vrot.lane.b32.xlu0 %v1326, 1
        %v1369 = vpop.permute.xlu0 %1368
        %1370 = vrot.lane.b32.xlu0 %v1327, 1
        %v1371 = vpop.permute.xlu0 %1370
        %1372 = vrot.lane.b32.xlu0 %v1328, 1
        %v1373 = vpop.permute.xlu0 %1372
        %1374 = vrot.lane.b32.xlu0 %v1329, 1
        %v1375 = vpop.permute.xlu0 %1374
        %1376 = vrot.lane.b32.xlu0 %v1330, 1
        %v1377 = vpop.permute.xlu0 %1376
        %1378 = vrot.lane.b32.xlu0 %v1331, 1
        %v1379 = vpop.permute.xlu0 %1378
        %1388 = vrot.lane.b32.xlu0 %v1324, 3
        %v1389 = vpop.permute.xlu0 %1388
        %1390 = vrot.lane.b32.xlu0 %v1325, 3
        %v1391 = vpop.permute.xlu0 %1390
        %1392 = vrot.lane.b32.xlu0 %v1326, 3
        %v1393 = vpop.permute.xlu0 %1392
        %1394 = vrot.lane.b32.xlu0 %v1327, 3
        %v1395 = vpop.permute.xlu0 %1394
        %1396 = vrot.lane.b32.xlu0 %v1328, 3
        %v1397 = vpop.permute.xlu0 %1396
        %1398 = vrot.lane.b32.xlu0 %v1329, 3
        %v1399 = vpop.permute.xlu0 %1398
        %1400 = vrot.lane.b32.xlu0 %v1330, 3
        %v1401 = vpop.permute.xlu0 %1400
        %1402 = vrot.lane.b32.xlu0 %v1331, 3
        %v1403 = vpop.permute.xlu0 %1402
        %v1412 = vsel %vm442, %v1341, %v1365
        %v1413 = vsel %vm442, %v1343, %v1367
        %v1414 = vsel %vm442, %v1345, %v1369
        %v1415 = vsel %vm442, %v1347, %v1371
        %v1416 = vsel %vm442, %v1349, %v1373
        %v1417 = vsel %vm442, %v1351, %v1375
        %v1418 = vsel %vm442, %v1353, %v1377
        %v1419 = vsel %vm442, %v1355, %v1379
        %v1420 = vsel %vm451, %v1412, %v1389
        %v1421 = vsel %vm451, %v1413, %v1391
        %v1422 = vsel %vm451, %v1414, %v1393
        %v1423 = vsel %vm451, %v1415, %v1395
        %v1424 = vsel %vm451, %v1416, %v1397
        %v1425 = vsel %vm451, %v1417, %v1399
        %v1426 = vsel %vm451, %v1418, %v1401
        %v1427 = vsel %vm451, %v1419, %v1403
        %1436 = vrot.lane.b32.xlu0 %v1420, 127
        %v1437 = vpop.permute.xlu0 %1436
        %1438 = vrot.lane.b32.xlu0 %v1421, 127
        %v1439 = vpop.permute.xlu0 %1438
        %1440 = vrot.lane.b32.xlu0 %v1422, 127
        %v1441 = vpop.permute.xlu0 %1440
        %1442 = vrot.lane.b32.xlu0 %v1423, 127
        %v1443 = vpop.permute.xlu0 %1442
        %1444 = vrot.lane.b32.xlu0 %v1424, 127
        %v1445 = vpop.permute.xlu0 %1444
        %1446 = vrot.lane.b32.xlu0 %v1425, 127
        %v1447 = vpop.permute.xlu0 %1446
        %1448 = vrot.lane.b32.xlu0 %v1426, 127
        %v1449 = vpop.permute.xlu0 %1448
        %1450 = vrot.lane.b32.xlu0 %v1427, 127
        %v1451 = vpop.permute.xlu0 %1450
        %v1460 = vadd.f32 %v1420, %v1437
        %v1461 = vadd.f32 %v1421, %v1439
        %v1462 = vadd.f32 %v1422, %v1441
        %v1463 = vadd.f32 %v1423, %v1443
        %v1464 = vadd.f32 %v1424, %v1445
        %v1465 = vadd.f32 %v1425, %v1447
        %v1466 = vadd.f32 %v1426, %v1449
        %v1467 = vadd.f32 %v1427, %v1451
        %1468 = vrot.lane.b32.xlu0 %v1420, 126
        %v1469 = vpop.permute.xlu0 %1468
        %1470 = vrot.lane.b32.xlu0 %v1421, 126
        %v1471 = vpop.permute.xlu0 %1470
        %1472 = vrot.lane.b32.xlu0 %v1422, 126
        %v1473 = vpop.permute.xlu0 %1472
        %1474 = vrot.lane.b32.xlu0 %v1423, 126
        %v1475 = vpop.permute.xlu0 %1474
        %1476 = vrot.lane.b32.xlu0 %v1424, 126
        %v1477 = vpop.permute.xlu0 %1476
        %1478 = vrot.lane.b32.xlu0 %v1425, 126
        %v1479 = vpop.permute.xlu0 %1478
        %1480 = vrot.lane.b32.xlu0 %v1426, 126
        %v1481 = vpop.permute.xlu0 %1480
        %1482 = vrot.lane.b32.xlu0 %v1427, 126
        %v1483 = vpop.permute.xlu0 %1482
        %v1492 = vadd.f32 %v1460, %v1469
        %v1493 = vadd.f32 %v1461, %v1471
        %v1494 = vadd.f32 %v1462, %v1473
        %v1495 = vadd.f32 %v1463, %v1475
        %v1496 = vadd.f32 %v1464, %v1477
        %v1497 = vadd.f32 %v1465, %v1479
        %v1498 = vadd.f32 %v1466, %v1481
        %v1499 = vadd.f32 %v1467, %v1483
        %v1500 = vmul.f32 %v1492, 0.11111111
        %v1501 = vmul.f32 %v1493, 0.11111111
        %v1502 = vmul.f32 %v1494, 0.11111111
        %v1503 = vmul.f32 %v1495, 0.11111111
        %v1504 = vmul.f32 %v1496, 0.11111111
        %v1505 = vmul.f32 %v1497, 0.11111111
        %v1506 = vmul.f32 %v1498, 0.11111111
        %v1507 = vmul.f32 %v1499, 0.11111111
        %v1508 = vmul.f32 %v844, %v844
        %v1509 = vmul.f32 %v845, %v845
        %v1510 = vmul.f32 %v846, %v846
        %v1511 = vmul.f32 %v847, %v847
        %v1512 = vmul.f32 %v848, %v848
        %v1513 = vmul.f32 %v849, %v849
        %v1514 = vmul.f32 %v850, %v850
        %v1515 = vmul.f32 %v851, %v851
        %v1516 = vsub.f32 %v1500, %v1508
        %v1517 = vsub.f32 %v1501, %v1509
        %v1518 = vsub.f32 %v1502, %v1510
        %v1519 = vsub.f32 %v1503, %v1511
        %v1520 = vsub.f32 %v1504, %v1512
        %v1521 = vsub.f32 %v1505, %v1513
        %v1522 = vsub.f32 %v1506, %v1514
        %v1523 = vsub.f32 %v1507, %v1515
        %v1524 = vmul.f32 %v207, %v215
        %v1525 = vmul.f32 %v208, %v216
        %v1526 = vmul.f32 %v209, %v217
        %v1527 = vmul.f32 %v210, %v218
        %v1528 = vmul.f32 %v211, %v219
        %v1529 = vmul.f32 %v212, %v220
        %v1530 = vmul.f32 %v213, %v221
        %v1531 = vmul.f32 %v214, %v222
        %v1536 = vrot.slane %v1524, 1
        %v1537 = vrot.slane %v1526, 1
        %v1538 = vrot.slane %v1528, 1
        %v1539 = vrot.slane %v1530, 1
        %v1548 = vrot.slane %v1524, 7
        %v1549 = vrot.slane %v1525, 7
        %v1550 = vsel %vm239, %v1548, %v1549
        %v1551 = vrot.slane %v1526, 7
        %v1552 = vrot.slane %v1527, 7
        %v1553 = vsel %vm239, %v1551, %v1552
        %v1554 = vrot.slane %v1528, 7
        %v1555 = vrot.slane %v1529, 7
        %v1556 = vsel %vm239, %v1554, %v1555
        %v1557 = vrot.slane %v1530, 7
        %v1558 = vrot.slane %v1531, 7
        %v1559 = vsel %vm239, %v1557, %v1558
        %v1572 = vrot.slane %v1525, 5
        %v1573 = vrot.slane %v1527, 5
        %v1574 = vrot.slane %v1529, 5
        %v1575 = vrot.slane %v1531, 5
        %v1580 = vsel %vm239, %v1536, %v1548
        %v1581 = vsel %vm239, %v1537, %v1551
        %v1582 = vsel %vm239, %v1538, %v1554
        %v1583 = vsel %vm239, %v1539, %v1557
        %v1584 = vsel %vm239, %v1549, %v1572
        %v1585 = vsel %vm239, %v1552, %v1573
        %v1586 = vsel %vm239, %v1555, %v1574
        %v1587 = vsel %vm239, %v1558, %v1575
        %v1596 = vrot.slane %v1580, 1
        %v1597 = vrot.slane %v1550, 1
        %v1598 = vsel %vm288, %v1596, %v1597
        %v1599 = vrot.slane %v1584, 1
        %v1600 = vsel %vm288, %v1597, %v1599
        %v1601 = vrot.slane %v1581, 1
        %v1602 = vrot.slane %v1553, 1
        %v1603 = vsel %vm288, %v1601, %v1602
        %v1604 = vrot.slane %v1585, 1
        %v1605 = vsel %vm288, %v1602, %v1604
        %v1606 = vrot.slane %v1582, 1
        %v1607 = vrot.slane %v1556, 1
        %v1608 = vsel %vm288, %v1606, %v1607
        %v1609 = vrot.slane %v1586, 1
        %v1610 = vsel %vm288, %v1607, %v1609
        %v1611 = vrot.slane %v1583, 1
        %v1612 = vrot.slane %v1559, 1
        %v1613 = vsel %vm288, %v1611, %v1612
        %v1614 = vrot.slane %v1587, 1
        %v1615 = vsel %vm288, %v1612, %v1614
        %v1624 = vadd.f32 %v1580, %v1598
        %v1625 = vadd.f32 %v1550, %v1600
        %v1626 = vadd.f32 %v1581, %v1603
        %v1627 = vadd.f32 %v1553, %v1605
        %v1628 = vadd.f32 %v1582, %v1608
        %v1629 = vadd.f32 %v1556, %v1610
        %v1630 = vadd.f32 %v1583, %v1613
        %v1631 = vadd.f32 %v1559, %v1615
        %v1632 = vrot.slane %v1580, 2
        %v1633 = vrot.slane %v1550, 2
        %v1634 = vsel %vm325, %v1632, %v1633
        %v1635 = vrot.slane %v1584, 2
        %v1636 = vsel %vm325, %v1633, %v1635
        %v1637 = vrot.slane %v1581, 2
        %v1638 = vrot.slane %v1553, 2
        %v1639 = vsel %vm325, %v1637, %v1638
        %v1640 = vrot.slane %v1585, 2
        %v1641 = vsel %vm325, %v1638, %v1640
        %v1642 = vrot.slane %v1582, 2
        %v1643 = vrot.slane %v1556, 2
        %v1644 = vsel %vm325, %v1642, %v1643
        %v1645 = vrot.slane %v1586, 2
        %v1646 = vsel %vm325, %v1643, %v1645
        %v1647 = vrot.slane %v1583, 2
        %v1648 = vrot.slane %v1559, 2
        %v1649 = vsel %vm325, %v1647, %v1648
        %v1650 = vrot.slane %v1587, 2
        %v1651 = vsel %vm325, %v1648, %v1650
        %v1660 = vadd.f32 %v1624, %v1634
        %v1661 = vadd.f32 %v1625, %v1636
        %v1662 = vadd.f32 %v1626, %v1639
        %v1663 = vadd.f32 %v1627, %v1641
        %v1664 = vadd.f32 %v1628, %v1644
        %v1665 = vadd.f32 %v1629, %v1646
        %v1666 = vadd.f32 %v1630, %v1649
        %v1667 = vadd.f32 %v1631, %v1651
        %1676 = vrot.lane.b32.xlu0 %v1660, 127
        %v1677 = vpop.permute.xlu0 %1676
        %1678 = vrot.lane.b32.xlu0 %v1661, 127
        %v1679 = vpop.permute.xlu0 %1678
        %1680 = vrot.lane.b32.xlu0 %v1662, 127
        %v1681 = vpop.permute.xlu0 %1680
        %1682 = vrot.lane.b32.xlu0 %v1663, 127
        %v1683 = vpop.permute.xlu0 %1682
        %1684 = vrot.lane.b32.xlu0 %v1664, 127
        %v1685 = vpop.permute.xlu0 %1684
        %1686 = vrot.lane.b32.xlu0 %v1665, 127
        %v1687 = vpop.permute.xlu0 %1686
        %1688 = vrot.lane.b32.xlu0 %v1666, 127
        %v1689 = vpop.permute.xlu0 %1688
        %1690 = vrot.lane.b32.xlu0 %v1667, 127
        %v1691 = vpop.permute.xlu0 %1690
        %1700 = vrot.lane.b32.xlu0 %v1660, 1
        %v1701 = vpop.permute.xlu0 %1700
        %1702 = vrot.lane.b32.xlu0 %v1661, 1
        %v1703 = vpop.permute.xlu0 %1702
        %1704 = vrot.lane.b32.xlu0 %v1662, 1
        %v1705 = vpop.permute.xlu0 %1704
        %1706 = vrot.lane.b32.xlu0 %v1663, 1
        %v1707 = vpop.permute.xlu0 %1706
        %1708 = vrot.lane.b32.xlu0 %v1664, 1
        %v1709 = vpop.permute.xlu0 %1708
        %1710 = vrot.lane.b32.xlu0 %v1665, 1
        %v1711 = vpop.permute.xlu0 %1710
        %1712 = vrot.lane.b32.xlu0 %v1666, 1
        %v1713 = vpop.permute.xlu0 %1712
        %1714 = vrot.lane.b32.xlu0 %v1667, 1
        %v1715 = vpop.permute.xlu0 %1714
        %1724 = vrot.lane.b32.xlu0 %v1660, 3
        %v1725 = vpop.permute.xlu0 %1724
        %1726 = vrot.lane.b32.xlu0 %v1661, 3
        %v1727 = vpop.permute.xlu0 %1726
        %1728 = vrot.lane.b32.xlu0 %v1662, 3
        %v1729 = vpop.permute.xlu0 %1728
        %1730 = vrot.lane.b32.xlu0 %v1663, 3
        %v1731 = vpop.permute.xlu0 %1730
        %1732 = vrot.lane.b32.xlu0 %v1664, 3
        %v1733 = vpop.permute.xlu0 %1732
        %1734 = vrot.lane.b32.xlu0 %v1665, 3
        %v1735 = vpop.permute.xlu0 %1734
        %1736 = vrot.lane.b32.xlu0 %v1666, 3
        %v1737 = vpop.permute.xlu0 %1736
        %1738 = vrot.lane.b32.xlu0 %v1667, 3
        %v1739 = vpop.permute.xlu0 %1738
        %v1748 = vsel %vm442, %v1677, %v1701
        %v1749 = vsel %vm442, %v1679, %v1703
        %v1750 = vsel %vm442, %v1681, %v1705
        %v1751 = vsel %vm442, %v1683, %v1707
        %v1752 = vsel %vm442, %v1685, %v1709
        %v1753 = vsel %vm442, %v1687, %v1711
        %v1754 = vsel %vm442, %v1689, %v1713
        %v1755 = vsel %vm442, %v1691, %v1715
        %v1756 = vsel %vm451, %v1748, %v1725
        %v1757 = vsel %vm451, %v1749, %v1727
        %v1758 = vsel %vm451, %v1750, %v1729
        %v1759 = vsel %vm451, %v1751, %v1731
        %v1760 = vsel %vm451, %v1752, %v1733
        %v1761 = vsel %vm451, %v1753, %v1735
        %v1762 = vsel %vm451, %v1754, %v1737
        %v1763 = vsel %vm451, %v1755, %v1739
        %1772 = vrot.lane.b32.xlu0 %v1756, 127
        %v1773 = vpop.permute.xlu0 %1772
        %1774 = vrot.lane.b32.xlu0 %v1757, 127
        %v1775 = vpop.permute.xlu0 %1774
        %1776 = vrot.lane.b32.xlu0 %v1758, 127
        %v1777 = vpop.permute.xlu0 %1776
        %1778 = vrot.lane.b32.xlu0 %v1759, 127
        %v1779 = vpop.permute.xlu0 %1778
        %1780 = vrot.lane.b32.xlu0 %v1760, 127
        %v1781 = vpop.permute.xlu0 %1780
        %1782 = vrot.lane.b32.xlu0 %v1761, 127
        %v1783 = vpop.permute.xlu0 %1782
        %1784 = vrot.lane.b32.xlu0 %v1762, 127
        %v1785 = vpop.permute.xlu0 %1784
        %1786 = vrot.lane.b32.xlu0 %v1763, 127
        %v1787 = vpop.permute.xlu0 %1786
        %v1796 = vadd.f32 %v1756, %v1773
        %v1797 = vadd.f32 %v1757, %v1775
        %v1798 = vadd.f32 %v1758, %v1777
        %v1799 = vadd.f32 %v1759, %v1779
        %v1800 = vadd.f32 %v1760, %v1781
        %v1801 = vadd.f32 %v1761, %v1783
        %v1802 = vadd.f32 %v1762, %v1785
        %v1803 = vadd.f32 %v1763, %v1787
        %1804 = vrot.lane.b32.xlu0 %v1756, 126
        %v1805 = vpop.permute.xlu0 %1804
        %1806 = vrot.lane.b32.xlu0 %v1757, 126
        %v1807 = vpop.permute.xlu0 %1806
        %1808 = vrot.lane.b32.xlu0 %v1758, 126
        %v1809 = vpop.permute.xlu0 %1808
        %1810 = vrot.lane.b32.xlu0 %v1759, 126
        %v1811 = vpop.permute.xlu0 %1810
        %1812 = vrot.lane.b32.xlu0 %v1760, 126
        %v1813 = vpop.permute.xlu0 %1812
        %1814 = vrot.lane.b32.xlu0 %v1761, 126
        %v1815 = vpop.permute.xlu0 %1814
        %1816 = vrot.lane.b32.xlu0 %v1762, 126
        %v1817 = vpop.permute.xlu0 %1816
        %1818 = vrot.lane.b32.xlu0 %v1763, 126
        %v1819 = vpop.permute.xlu0 %1818
        %v1828 = vadd.f32 %v1796, %v1805
        %v1829 = vadd.f32 %v1797, %v1807
        %v1830 = vadd.f32 %v1798, %v1809
        %v1831 = vadd.f32 %v1799, %v1811
        %v1832 = vadd.f32 %v1800, %v1813
        %v1833 = vadd.f32 %v1801, %v1815
        %v1834 = vadd.f32 %v1802, %v1817
        %v1835 = vadd.f32 %v1803, %v1819
        %v1836 = vmul.f32 %v1828, 0.11111111
        %v1837 = vmul.f32 %v1829, 0.11111111
        %v1838 = vmul.f32 %v1830, 0.11111111
        %v1839 = vmul.f32 %v1831, 0.11111111
        %v1840 = vmul.f32 %v1832, 0.11111111
        %v1841 = vmul.f32 %v1833, 0.11111111
        %v1842 = vmul.f32 %v1834, 0.11111111
        %v1843 = vmul.f32 %v1835, 0.11111111
        %v1844 = vmul.f32 %v532, %v844
        %v1845 = vmul.f32 %v533, %v845
        %v1846 = vmul.f32 %v534, %v846
        %v1847 = vmul.f32 %v535, %v847
        %v1848 = vmul.f32 %v536, %v848
        %v1849 = vmul.f32 %v537, %v849
        %v1850 = vmul.f32 %v538, %v850
        %v1851 = vmul.f32 %v539, %v851
        %v1852 = vsub.f32 %v1836, %v1844
        %v1853 = vsub.f32 %v1837, %v1845
        %v1854 = vsub.f32 %v1838, %v1846
        %v1855 = vsub.f32 %v1839, %v1847
        %v1856 = vsub.f32 %v1840, %v1848
        %v1857 = vsub.f32 %v1841, %v1849
        %v1858 = vsub.f32 %v1842, %v1850
        %v1859 = vsub.f32 %v1843, %v1851
        %v1860 = vmul.f32 %v532, 2.0
        %v1861 = vmul.f32 %v533, 2.0
        %v1862 = vmul.f32 %v534, 2.0
        %v1863 = vmul.f32 %v535, 2.0
        %v1864 = vmul.f32 %v536, 2.0
        %v1865 = vmul.f32 %v537, 2.0
        %v1866 = vmul.f32 %v538, 2.0
        %v1867 = vmul.f32 %v539, 2.0
        %v1868 = vmul.f32 %v1860, %v844
        %v1869 = vmul.f32 %v1861, %v845
        %v1870 = vmul.f32 %v1862, %v846
        %v1871 = vmul.f32 %v1863, %v847
        %v1872 = vmul.f32 %v1864, %v848
        %v1873 = vmul.f32 %v1865, %v849
        %v1874 = vmul.f32 %v1866, %v850
        %v1875 = vmul.f32 %v1867, %v851
        %v1876 = vadd.f32 %v1868, 0.0001
        %v1877 = vadd.f32 %v1869, 0.0001
        %v1878 = vadd.f32 %v1870, 0.0001
        %v1879 = vadd.f32 %v1871, 0.0001
        %v1880 = vadd.f32 %v1872, 0.0001
        %v1881 = vadd.f32 %v1873, 0.0001
        %v1882 = vadd.f32 %v1874, 0.0001
        %v1883 = vadd.f32 %v1875, 0.0001
        %v1884 = vmul.f32 %v1852, 2.0
        %v1885 = vmul.f32 %v1853, 2.0
        %v1886 = vmul.f32 %v1854, 2.0
        %v1887 = vmul.f32 %v1855, 2.0
        %v1888 = vmul.f32 %v1856, 2.0
        %v1889 = vmul.f32 %v1857, 2.0
        %v1890 = vmul.f32 %v1858, 2.0
        %v1891 = vmul.f32 %v1859, 2.0
        %v1892 = vadd.f32 %v1884, 0.0009
        %v1893 = vadd.f32 %v1885, 0.0009
        %v1894 = vadd.f32 %v1886, 0.0009
        %v1895 = vadd.f32 %v1887, 0.0009
        %v1896 = vadd.f32 %v1888, 0.0009
        %v1897 = vadd.f32 %v1889, 0.0009
        %v1898 = vadd.f32 %v1890, 0.0009
        %v1899 = vadd.f32 %v1891, 0.0009
        %v1900 = vmul.f32 %v1876, %v1892
        %v1901 = vmul.f32 %v1877, %v1893
        %v1902 = vmul.f32 %v1878, %v1894
        %v1903 = vmul.f32 %v1879, %v1895
        %v1904 = vmul.f32 %v1880, %v1896
        %v1905 = vmul.f32 %v1881, %v1897
        %v1906 = vmul.f32 %v1882, %v1898
        %v1907 = vmul.f32 %v1883, %v1899
        %v1908 = vadd.f32 %v1172, %v1508
        %v1909 = vadd.f32 %v1173, %v1509
        %v1910 = vadd.f32 %v1174, %v1510
        %v1911 = vadd.f32 %v1175, %v1511
        %v1912 = vadd.f32 %v1176, %v1512
        %v1913 = vadd.f32 %v1177, %v1513
        %v1914 = vadd.f32 %v1178, %v1514
        %v1915 = vadd.f32 %v1179, %v1515
        %v1916 = vadd.f32 %v1908, 0.0001
        %v1917 = vadd.f32 %v1909, 0.0001
        %v1918 = vadd.f32 %v1910, 0.0001
        %v1919 = vadd.f32 %v1911, 0.0001
        %v1920 = vadd.f32 %v1912, 0.0001
        %v1921 = vadd.f32 %v1913, 0.0001
        %v1922 = vadd.f32 %v1914, 0.0001
        %v1923 = vadd.f32 %v1915, 0.0001
        %v1924 = vadd.f32 %v1180, %v1516
        %v1925 = vadd.f32 %v1181, %v1517
        %v1926 = vadd.f32 %v1182, %v1518
        %v1927 = vadd.f32 %v1183, %v1519
        %v1928 = vadd.f32 %v1184, %v1520
        %v1929 = vadd.f32 %v1185, %v1521
        %v1930 = vadd.f32 %v1186, %v1522
        %v1931 = vadd.f32 %v1187, %v1523
        %v1932 = vadd.f32 %v1924, 0.0009
        %v1933 = vadd.f32 %v1925, 0.0009
        %v1934 = vadd.f32 %v1926, 0.0009
        %v1935 = vadd.f32 %v1927, 0.0009
        %v1936 = vadd.f32 %v1928, 0.0009
        %v1937 = vadd.f32 %v1929, 0.0009
        %v1938 = vadd.f32 %v1930, 0.0009
        %v1939 = vadd.f32 %v1931, 0.0009
        %v1940 = vmul.f32 %v1916, %v1932
        %v1941 = vmul.f32 %v1917, %v1933
        %v1942 = vmul.f32 %v1918, %v1934
        %v1943 = vmul.f32 %v1919, %v1935
        %v1944 = vmul.f32 %v1920, %v1936
        %v1945 = vmul.f32 %v1921, %v1937
        %v1946 = vmul.f32 %v1922, %v1938
        %v1947 = vmul.f32 %v1923, %v1939
        %v1948 = vrcp.pop %v1940
        %v1949 = vmul.f32 %v1900, %v1948
        %v1950 = vrcp.pop %v1941
        %v1951 = vmul.f32 %v1901, %v1950
        %v1952 = vrcp.pop %v1942
        %v1953 = vmul.f32 %v1902, %v1952
        %v1954 = vrcp.pop %v1943
        %v1955 = vmul.f32 %v1903, %v1954
        %v1956 = vrcp.pop %v1944
        %v1957 = vmul.f32 %v1904, %v1956
        %v1958 = vrcp.pop %v1945
        %v1959 = vmul.f32 %v1905, %v1958
        %v1960 = vrcp.pop %v1946
        %v1961 = vmul.f32 %v1906, %v1960
        %v1962 = vrcp.pop %v1947
        %v1963 = vmul.f32 %v1907, %v1962
        %v1964 = vsub.f32 1.0, %v1949
        %v1965 = vsub.f32 1.0, %v1951
        %v1966 = vsub.f32 1.0, %v1953
        %v1967 = vsub.f32 1.0, %v1955
        %v1968 = vsub.f32 1.0, %v1957
        %v1969 = vsub.f32 1.0, %v1959
        %v1970 = vsub.f32 1.0, %v1961
        %v1971 = vsub.f32 1.0, %v1963
        %v1972 = vmul.f32 %v1964, 0.5
        %v1973 = vmul.f32 %v1965, 0.5
        %v1974 = vmul.f32 %v1966, 0.5
        %v1975 = vmul.f32 %v1967, 0.5
        %v1976 = vmul.f32 %v1968, 0.5
        %v1977 = vmul.f32 %v1969, 0.5
        %v1978 = vmul.f32 %v1970, 0.5
        %v1979 = vmul.f32 %v1971, 0.5
        %v1980 = vmax.f32 %v1972, 0.0
        %v1981 = vmax.f32 %v1973, 0.0
        %v1982 = vmax.f32 %v1974, 0.0
        %v1983 = vmax.f32 %v1975, 0.0
        %v1984 = vmax.f32 %v1976, 0.0
        %v1985 = vmax.f32 %v1977, 0.0
        %v1986 = vmax.f32 %v1978, 0.0
        %v1987 = vmax.f32 %v1979, 0.0
        %v1988 = vmin.f32 %v1980, 1.0
        %v1989 = vmin.f32 %v1981, 1.0
        %v1990 = vmin.f32 %v1982, 1.0
        %v1991 = vmin.f32 %v1983, 1.0
        %v1992 = vmin.f32 %v1984, 1.0
        %v1993 = vmin.f32 %v1985, 1.0
        %v1994 = vmin.f32 %v1986, 1.0
        %v1995 = vmin.f32 %v1987, 1.0
        %vm1996 = vcmask 130048
        %1997 = vst.msk [vmem:[%s203] sm:$0xff] %vm1996, %v1988
        %1998 = vst.msk [vmem:[%s203 + $0x8] sm:$0xff] %vm1996, %v1989
        %1999 = vst.msk [vmem:[%s203 + $0x10] sm:$0xff] %vm1996, %v1990
        %2000 = vst.msk [vmem:[%s203 + $0x18] sm:$0xff] %vm1996, %v1991
        %2001 = vst.msk [vmem:[%s203 + $0x20] sm:$0xff] %vm1996, %v1992
        %2002 = vst.msk [vmem:[%s203 + $0x28] sm:$0xff] %vm1996, %v1993
        %2003 = vst.msk [vmem:[%s203 + $0x30] sm:$0xff] %vm1996, %v1994
        %2004 = vst.msk [vmem:[%s203 + $0x38] sm:$0xff] %vm1996, %v1995
        %s2005 = sand.u32 %s82, 1
        %s2006 = scalar_lea.sflag [#allocation4], %s2005
        %s2007 = sand.u32 %s82, 1
        %s2008 = smul.addr %s2007, 64
        %s2009 = scalar_lea.vmem [#allocation7], %s2008
        // Predicated region
        $region37: #{tpu_custom_call.1} parent=27 // pred_check
          %p2010 = pneg %p92
        $region38: #{tpu_custom_call.1} parent=27 // pred_check_branch
          %2012 = sbr.rel (%p2010) target = $region40
        $region39: #{tpu_custom_call.1} parent=27 // pred_region
          %s2013 = smul.u32 4, %s22
          %s2015 = ssub.s32 1024, 1024
          %2016 = vsyncadd %s2006, %s2015
          %s2017 = smul.addr %s2013, 2
          %s2018 = smul.addr %s2017, 128
          %s2019 = scalar_lea.hbm %s2, %s2018
          %s2020 = sshll.u32 %s2009, 4
          %s2021 = int_to_ptr.vmem [resolvable:$true] %s2020
          %2026 = dma.vmem_to_hbm [thread:$0]  %s2021, 1024, %s2019, %s2006, 128, 128, 8
        $region40: #{tpu_custom_call.1} parent=27 // pred_fallthru
          _
      $region28: #{tpu_custom_call.1} parent=5 // pred_fallthru
        _
      %p2027 = scmp.le.s32.totalorder 2, %s17
      // Predicated region
      $region41: #{tpu_custom_call.1} parent=5 // pred_check
        %p2028 = pneg %p2027
      $region42: #{tpu_custom_call.1} parent=5 // pred_check_branch
        %2030 = sbr.rel (%p2028) target = $region44
      $region43: #{tpu_custom_call.1} parent=5 // pred_region
        %s2031 = ssub.s32 %s17, 2
        // Predicated region
        $region45: #{tpu_custom_call.1} parent=43 // pred_check
          %p2032 = pneg %p98
        $region46: #{tpu_custom_call.1} parent=43 // pred_check_branch
          %2034 = sbr.rel (%p2032) target = $region48
        $region47: #{tpu_custom_call.1} parent=43 // pred_region
          %s2035 = sand.u32 %s83, 1
          %s2036 = scalar_lea.sflag [#allocation4], %s2035
          %s2037 = sand.u32 %s83, 1
          %s2038 = smul.addr %s2037, 64
          %s2039 = scalar_lea.vmem [#allocation7], %s2038
          %2040 = dma.done %s2036, 1024
        $region48: #{tpu_custom_call.1} parent=43 // pred_fallthru
          _
      $region44: #{tpu_custom_call.1} parent=5 // pred_fallthru
        _
    $region6: #{tpu_custom_call.1} parent=1 // loop_footer
      %s21 = sadd.s32 1, %s17
    $region7: #{tpu_custom_call.1} parent=1 // loop_footer_branch
      %16 = sbr.rel target = $region3
    $region8: #{tpu_custom_call.1} parent=1 // loop_exit
      _
    %2041 = vsyncpa [#allocation3], 1
    %s2042 = scalar_lea.sflag [#allocation3], 1
    %2043 = vsyncpa %s2042, 1
    %2044 = vsyncpa [#allocation6], 1
    %s2045 = scalar_lea.sflag [#allocation6], 1
    %2046 = vsyncpa %s2045, 1
    %2047 = vsyncpa [#allocation4], 1
    %s2048 = scalar_lea.sflag [#allocation4], 1
    %2049 = vsyncpa %s2048, 1

</llo_original>
